<compile_context>
chip_gen: v7x
topology: tpu7x:2x2x1
jax: 0.10.0
libtpu: 0.0.40
codegen_flags: <defaults>
</compile_context>

<pallas_src>
import functools
import math

import jax
import jax.numpy as jnp
from jax import lax
from jax.experimental import pallas as pl
from jax.experimental.pallas import tpu as pltpu

LAYER_NUM = 3
DILATIONS = tuple(3 ** i for i in range(LAYER_NUM))
HALO = 16                      # zero rows around/between batch elements:
                               # >= max dilation (9) and a multiple of the
                               # bf16 sublane tile (16) so the per-layer
                               # contiguous store stays tile aligned.
VMEM_BUDGET = 20 << 20         # target per-step footprint (fits v7x's 32 MiB
                               # default scoped VMEM limit with headroom)
MAX_BATCH_BLOCK = 64           # bounds in-kernel unrolling over batch elements


def atrous_kernel(x_ref, w_ref, b_ref, o_ref, s_ref, *, seq_len, batch_block):
    """One grid step = `batch_block` whole sequences.

    x_ref : (bb*L, C) f32            flattened channels-last input rows
    w_ref : (LAYER_NUM*3, C, C) bf16 [layer*3 + tap, cin, cout]
    b_ref : (LAYER_NUM, 1, C) f32
    o_ref : (bb*L, C) f32
    s_ref : (bb*L + (bb+1)*HALO, C) bf16   zero-gapped activation scratch
    """
    L, bb, P = seq_len, batch_block, HALO
    C = x_ref.shape[1]
    Mi = bb * L + (bb - 1) * P      # rows spanned by the per-layer dots
    stride = L + P                  # element k interior starts at P + k*stride

    zero_gap = jnp.zeros((P, C), dtype=s_ref.dtype)

    # Zero every gap / halo strip once (interiors are overwritten every layer).
    for g in range(bb + 1):
        s_ref[g * stride:g * stride + P, :] = zero_gap

    # Layer-0 activation: relu(x) per batch element straight into the scratch.
    # x itself is NOT kept live; it is re-read for the residual at the end.
    for k in range(bb):
        s_ref[P + k * stride:P + k * stride + L, :] = jnp.maximum(
            x_ref[k * L:(k + 1) * L, :], 0.0).astype(s_ref.dtype)

    y = None
    for i in range(LAYER_NUM):
        d = DILATIONS[i]
        if i > 0:
            # Previous layer's output: ONE contiguous bf16 store over the whole
            # gapped interior, then re-zero the (bb-1) internal gaps.
            s_ref[P:P + Mi, :] = jnp.maximum(y, 0.0).astype(s_ref.dtype)
            for g in range(1, bb):
                s_ref[g * stride:g * stride + P, :] = zero_gap

        # Dilated "same" conv = 3 accumulating MXU dots on shifted row-slices
        # of the scratch.  Taps that would cross a batch boundary land in the
        # zero gaps, so no masking is needed.
        left = s_ref[P - d:P - d + Mi, :]
        center = s_ref[P:P + Mi, :]
        right = s_ref[P + d:P + d + Mi, :]
        y = jnp.dot(left, w_ref[3 * i + 0], preferred_element_type=jnp.float32)
        y = y + jnp.dot(center, w_ref[3 * i + 1],
                        preferred_element_type=jnp.float32)
        y = y + jnp.dot(right, w_ref[3 * i + 2],
                        preferred_element_type=jnp.float32)
        y = y + b_ref[i]

    # Residual + final ReLU; x re-read from VMEM (vld slots are idle here).
    for k in range(bb):
        yk = y[k * stride:k * stride + L, :]
        o_ref[k * L:(k + 1) * L, :] = jnp.maximum(
            yk + x_ref[k * L:(k + 1) * L, :], 0.0).astype(o_ref.dtype)


def _num_tensorcores():
    """How many TensorCores a 'parallel' Pallas grid axis can shard across."""
    try:
        kind = jax.devices()[0].device_kind.lower()
    except Exception:
        return 1
    if "v7" in kind:
        return 2
    if ("v4" in kind or "v5p" in kind) and "lite" not in kind:
        return 2                    # megacore
    return 1                        # v5e / v6e: single TensorCore


def _choose_batch_block(B, L, C, num_tc):
    """Largest batch_block that fits the VMEM budget, keeps (bb*L) 8-row
    aligned when bb < B, divides B, and (on multi-TC chips only) leaves at
    least `num_tc` grid steps."""
    fixed = 2 * (LAYER_NUM * 3 * C * C * 2 + LAYER_NUM * C * 4)   # dbl-buf w,b
    per_row = 4 * C * 4 + C * 2     # in+out f32 double-buffered + bf16 scratch
    bb_cap = max(1, (VMEM_BUDGET - fixed) // max(1, L * per_row))
    bb_cap = min(bb_cap, MAX_BATCH_BLOCK, B)
    step = 8 // math.gcd(L, 8)      # (bb*L) % 8 == 0  <=>  bb % step == 0

    cands = [bb for bb in range(1, bb_cap + 1)
             if B % bb == 0 and (bb == B or bb % step == 0)]
    if not cands:
        return B                    # single full-array block (always legal)
    bb = max(cands)
    if num_tc > 1 and B // bb < num_tc:   # only split where a 2nd TC exists
        smaller = [v for v in cands if v <= B // num_tc]
        if smaller:
            bb = max(smaller)
    return bb


def prepare_atrous_params(w, b):
    """One-time parameter prep (NOT per forward): bf16 MXU weights laid out as
    [layer*3 + tap, cin, cout] and f32 bias as (LAYER_NUM, 1, C)."""
    ln, taps, cin, cout = w.shape
    w9 = w.astype(jnp.bfloat16).reshape(ln * taps, cin, cout)
    b3 = b.astype(jnp.float32)[:, None, :]
    return w9, b3


def atrous_block(x_blc, w9, b3, *, batch_block=None):
    """Atrous_block forward.

    x_blc: (B, L, C) float32, channels-last (module's NCL layout maps here via
           a single caller-side transpose if needed).
    w9:    (LAYER_NUM*3, C, C) bfloat16 from prepare_atrous_params.
    b3:    (LAYER_NUM, 1, C) float32 from prepare_atrous_params.
    Returns (B, L, C) float32.   (Best perf when C % 128 == 0.)
    """
    B, L, C = x_blc.shape
    num_tc = _num_tensorcores()
    bb = batch_block if batch_block is not None else _choose_batch_block(
        B, L, C, num_tc)
    num_blocks = B // bb
    M = bb * L
    G = M + (bb + 1) * HALO

    # Per-step VMEM footprint estimate -> scoped VMEM limit (32..48 MiB).
    fixed = 2 * (w9.size * 2 + b3.size * 4)
    vmem_needed = fixed + 2 * 2 * M * C * 4 + G * C * 2
    vmem_limit = int(min(max(2 * vmem_needed, 32 << 20), 48 << 20))

    x_flat = x_blc.reshape(B * L, C)            # free, contiguous reshape

    kernel = functools.partial(atrous_kernel, seq_len=L, batch_block=bb)
    out_flat = pl.pallas_call(
        kernel,
        out_shape=jax.ShapeDtypeStruct((B * L, C), x_blc.dtype),
        grid=(num_blocks,),
        in_specs=[
            pl.BlockSpec((M, C), lambda i: (i, 0)),
            pl.BlockSpec(w9.shape, lambda i: (0, 0, 0)),
            pl.BlockSpec(b3.shape, lambda i: (0, 0, 0)),
        ],
        out_specs=pl.BlockSpec((M, C), lambda i: (i, 0)),
        scratch_shapes=[pltpu.VMEM((G, C), jnp.bfloat16)],
        compiler_params=pltpu.CompilerParams(
            dimension_semantics=("parallel",),
            vmem_limit_bytes=vmem_limit),
    )(x_flat, w9, b3)
    return out_flat.reshape(B, L, C)


def atrous_block_ref(x_ncl, w, b):
    """Pure-JAX reference (PyTorch Conv1d semantics), NCL layout.
    w: (LAYER_NUM, 3, Cin, Cout), b: (LAYER_NUM, C)."""
    y = x_ncl
    for i in range(LAYER_NUM):
        a = jnp.maximum(y, 0.0)
        d = DILATIONS[i]
        wt = jnp.transpose(w[i], (2, 1, 0))          # (Cout, Cin, K)
        y = lax.conv_general_dilated(
            a, wt, window_strides=(1,), padding=[(d, d)], rhs_dilation=(d,),
            dimension_numbers=("NCH", "OIH", "NCH"))
        y = y + b[i][None, :, None]
    return jnp.maximum(y + x_ncl, 0.0)


if __name__ == "__main__":
    B, C, L = 2, 128, 16                          # batch, channels, length
    key = jax.random.PRNGKey(0)
    kx, kw, kb = jax.random.split(key, 3)

    x_blc = jax.random.normal(kx, (B, L, C), dtype=jnp.float32)
    # weights in kernel layout: (layer, tap, cin, cout); deterministic init.
    w = 0.05 * jax.random.normal(kw, (LAYER_NUM, 3, C, C), dtype=jnp.float32)
    b = 0.05 * jax.random.normal(kb, (LAYER_NUM, C), dtype=jnp.float32)

    w9, b3 = prepare_atrous_params(w, b)          # one-time prep (item 11)
    out = jax.block_until_ready(atrous_block(x_blc, w9, b3))

    # Reference in NCL layout (transpose is test-only, not in the kernel path).
    # Round weights to bf16 to match the kernel's MXU input precision.
    x_ncl = jnp.transpose(x_blc, (0, 2, 1))
    w_r = w.astype(jnp.bfloat16).astype(jnp.float32)
    ref = jnp.transpose(
        jax.block_until_ready(atrous_block_ref(x_ncl, w_r, b)), (0, 2, 1))

    assert out.shape == (B, L, C)
    assert jnp.allclose(out, ref, rtol=2e-2, atol=2e-2), "mismatch vs reference"
    print("KERNEL_OK")
</pallas_src>

<mosaic_0001>
module attributes {stable_mosaic.version = 11 : i64} {
  func.func @atrous_kernel(%arg0: i32, %arg1: memref<32x128xf32, #tpu.memory_space<vmem>>, %arg2: memref<9x128x128xbf16, #tpu.memory_space<vmem>>, %arg3: memref<3x1x128xf32, #tpu.memory_space<vmem>>, %arg4: memref<32x128xf32, #tpu.memory_space<vmem>>, %arg5: memref<80x128xbf16, #tpu.memory_space<vmem>>) attributes {dimension_semantics = [#tpu.dimension_semantics<parallel>], iteration_bounds = array<i64: 1>, scalar_prefetch = 0 : i64, scratch_operands = 1 : i64, tpu.core_type = #tpu.core_type<tc>, window_params = [{transform_indices = @transform_0, window_bounds = array<i64: 32, 128>}, {pipeline_mode = #tpu.pipeline_mode<synchronous>, transform_indices = @transform_1, window_bounds = array<i64: 9, 128, 128>}, {pipeline_mode = #tpu.pipeline_mode<synchronous>, transform_indices = @transform_2, window_bounds = array<i64: 3, 1, 128>}, {transform_indices = @transform_3, window_bounds = array<i64: 32, 128>}]} {
    %cst = arith.constant 0.000000e+00 : bf16
    %0 = vector.broadcast %cst : bf16 to vector<16x128xbf16>
    %c0 = arith.constant 0 : index
    %c0_0 = arith.constant 0 : index
    %1 = vector.load %arg5[%c0, %c0_0] : memref<80x128xbf16, #tpu.memory_space<vmem>>, vector<16x128xbf16>
    tpu.vector_store %arg5[%c0, %c0_0], %0 {strides = array<i32>} : memref<80x128xbf16, #tpu.memory_space<vmem>>, vector<16x128xbf16>,
    %c32 = arith.constant 32 : index
    %c0_1 = arith.constant 0 : index
    %2 = vector.load %arg5[%c32, %c0_1] : memref<80x128xbf16, #tpu.memory_space<vmem>>, vector<16x128xbf16>
    tpu.vector_store %arg5[%c32, %c0_1], %0 {strides = array<i32>} : memref<80x128xbf16, #tpu.memory_space<vmem>>, vector<16x128xbf16>,
    %c64 = arith.constant 64 : index
    %c0_2 = arith.constant 0 : index
    %3 = vector.load %arg5[%c64, %c0_2] : memref<80x128xbf16, #tpu.memory_space<vmem>>, vector<16x128xbf16>
    tpu.vector_store %arg5[%c64, %c0_2], %0 {strides = array<i32>} : memref<80x128xbf16, #tpu.memory_space<vmem>>, vector<16x128xbf16>,
    %c0_3 = arith.constant 0 : index
    %c0_4 = arith.constant 0 : index
    %4 = vector.load %arg1[%c0_3, %c0_4] : memref<32x128xf32, #tpu.memory_space<vmem>>, vector<16x128xf32>
    %cst_5 = arith.constant 0.000000e+00 : f32
    %5 = vector.broadcast %cst_5 : f32 to vector<16x128xf32>
    %6 = arith.maximumf %4, %5 : vector<16x128xf32>
    %7 = arith.truncf %6 : vector<16x128xf32> to vector<16x128xbf16>
    %c16 = arith.constant 16 : index
    %c0_6 = arith.constant 0 : index
    %8 = vector.load %arg5[%c16, %c0_6] : memref<80x128xbf16, #tpu.memory_space<vmem>>, vector<16x128xbf16>
    tpu.vector_store %arg5[%c16, %c0_6], %7 {strides = array<i32>} : memref<80x128xbf16, #tpu.memory_space<vmem>>, vector<16x128xbf16>,
    %c16_7 = arith.constant 16 : index
    %c0_8 = arith.constant 0 : index
    %9 = vector.load %arg1[%c16_7, %c0_8] : memref<32x128xf32, #tpu.memory_space<vmem>>, vector<16x128xf32>
    %cst_9 = arith.constant 0.000000e+00 : f32
    %10 = vector.broadcast %cst_9 : f32 to vector<16x128xf32>
    %11 = arith.maximumf %9, %10 : vector<16x128xf32>
    %12 = arith.truncf %11 : vector<16x128xf32> to vector<16x128xbf16>
    %c48 = arith.constant 48 : index
    %c0_10 = arith.constant 0 : index
    %13 = vector.load %arg5[%c48, %c0_10] : memref<80x128xbf16, #tpu.memory_space<vmem>>, vector<16x128xbf16>
    tpu.vector_store %arg5[%c48, %c0_10], %12 {strides = array<i32>} : memref<80x128xbf16, #tpu.memory_space<vmem>>, vector<16x128xbf16>,
    %c15 = arith.constant 15 : index
    %c0_11 = arith.constant 0 : index
    %14 = vector.load %arg5[%c15, %c0_11] : memref<80x128xbf16, #tpu.memory_space<vmem>>, vector<48x128xbf16>
    %c16_12 = arith.constant 16 : index
    %c0_13 = arith.constant 0 : index
    %15 = vector.load %arg5[%c16_12, %c0_13] : memref<80x128xbf16, #tpu.memory_space<vmem>>, vector<48x128xbf16>
    %c17 = arith.constant 17 : index
    %c0_14 = arith.constant 0 : index
    %16 = vector.load %arg5[%c17, %c0_14] : memref<80x128xbf16, #tpu.memory_space<vmem>>, vector<48x128xbf16>
    %c0_15 = arith.constant 0 : index
    %c0_16 = arith.constant 0 : index
    %c0_17 = arith.constant 0 : index
    %17 = vector.load %arg2[%c0_15, %c0_16, %c0_17] : memref<9x128x128xbf16, #tpu.memory_space<vmem>>, vector<1x128x128xbf16>
    %18 = vector.shape_cast %17 : vector<1x128x128xbf16> to vector<128x128xbf16>
    %cst_18 = arith.constant dense<0.000000e+00> : vector<48x128xf32>
    %19 = tpu.matmul %14, %18, %cst_18 {dimension_numbers = #tpu.dot_dimension_numbers<[1], [0], [0], [1], [0, 0, 1, 1], [], []>} : vector<48x128xbf16>, vector<128x128xbf16>, vector<48x128xf32> -> vector<48x128xf32>
    %c1 = arith.constant 1 : index
    %c0_19 = arith.constant 0 : index
    %c0_20 = arith.constant 0 : index
    %20 = vector.load %arg2[%c1, %c0_19, %c0_20] : memref<9x128x128xbf16, #tpu.memory_space<vmem>>, vector<1x128x128xbf16>
    %21 = vector.shape_cast %20 : vector<1x128x128xbf16> to vector<128x128xbf16>
    %cst_21 = arith.constant dense<0.000000e+00> : vector<48x128xf32>
    %22 = tpu.matmul %15, %21, %cst_21 {dimension_numbers = #tpu.dot_dimension_numbers<[1], [0], [0], [1], [0, 0, 1, 1], [], []>} : vector<48x128xbf16>, vector<128x128xbf16>, vector<48x128xf32> -> vector<48x128xf32>
    %23 = arith.addf %19, %22 : vector<48x128xf32>
    %c2 = arith.constant 2 : index
    %c0_22 = arith.constant 0 : index
    %c0_23 = arith.constant 0 : index
    %24 = vector.load %arg2[%c2, %c0_22, %c0_23] : memref<9x128x128xbf16, #tpu.memory_space<vmem>>, vector<1x128x128xbf16>
    %25 = vector.shape_cast %24 : vector<1x128x128xbf16> to vector<128x128xbf16>
    %cst_24 = arith.constant dense<0.000000e+00> : vector<48x128xf32>
    %26 = tpu.matmul %16, %25, %cst_24 {dimension_numbers = #tpu.dot_dimension_numbers<[1], [0], [0], [1], [0, 0, 1, 1], [], []>} : vector<48x128xbf16>, vector<128x128xbf16>, vector<48x128xf32> -> vector<48x128xf32>
    %27 = arith.addf %23, %26 : vector<48x128xf32>
    %c0_25 = arith.constant 0 : index
    %c0_26 = arith.constant 0 : index
    %c0_27 = arith.constant 0 : index
    %28 = vector.load %arg3[%c0_25, %c0_26, %c0_27] : memref<3x1x128xf32, #tpu.memory_space<vmem>>, vector<1x1x128xf32>
    %29 = vector.shape_cast %28 : vector<1x1x128xf32> to vector<1x128xf32>
    %30 = vector.broadcast %29 : vector<1x128xf32> to vector<48x128xf32>
    %31 = arith.addf %27, %30 : vector<48x128xf32>
    %cst_28 = arith.constant 0.000000e+00 : f32
    %32 = vector.broadcast %cst_28 : f32 to vector<48x128xf32>
    %33 = arith.maximumf %31, %32 : vector<48x128xf32>
    %34 = arith.truncf %33 : vector<48x128xf32> to vector<48x128xbf16>
    %c16_29 = arith.constant 16 : index
    %c0_30 = arith.constant 0 : index
    %35 = vector.load %arg5[%c16_29, %c0_30] : memref<80x128xbf16, #tpu.memory_space<vmem>>, vector<48x128xbf16>
    tpu.vector_store %arg5[%c16_29, %c0_30], %34 {strides = array<i32>} : memref<80x128xbf16, #tpu.memory_space<vmem>>, vector<48x128xbf16>,
    %c32_31 = arith.constant 32 : index
    %c0_32 = arith.constant 0 : index
    %36 = vector.load %arg5[%c32_31, %c0_32] : memref<80x128xbf16, #tpu.memory_space<vmem>>, vector<16x128xbf16>
    tpu.vector_store %arg5[%c32_31, %c0_32], %0 {strides = array<i32>} : memref<80x128xbf16, #tpu.memory_space<vmem>>, vector<16x128xbf16>,
    %c13 = arith.constant 13 : index
    %c0_33 = arith.constant 0 : index
    %37 = vector.load %arg5[%c13, %c0_33] : memref<80x128xbf16, #tpu.memory_space<vmem>>, vector<48x128xbf16>
    %c16_34 = arith.constant 16 : index
    %c0_35 = arith.constant 0 : index
    %38 = vector.load %arg5[%c16_34, %c0_35] : memref<80x128xbf16, #tpu.memory_space<vmem>>, vector<48x128xbf16>
    %c19 = arith.constant 19 : index
    %c0_36 = arith.constant 0 : index
    %39 = vector.load %arg5[%c19, %c0_36] : memref<80x128xbf16, #tpu.memory_space<vmem>>, vector<48x128xbf16>
    %c3 = arith.constant 3 : index
    %c0_37 = arith.constant 0 : index
    %c0_38 = arith.constant 0 : index
    %40 = vector.load %arg2[%c3, %c0_37, %c0_38] : memref<9x128x128xbf16, #tpu.memory_space<vmem>>, vector<1x128x128xbf16>
    %41 = vector.shape_cast %40 : vector<1x128x128xbf16> to vector<128x128xbf16>
    %cst_39 = arith.constant dense<0.000000e+00> : vector<48x128xf32>
    %42 = tpu.matmul %37, %41, %cst_39 {dimension_numbers = #tpu.dot_dimension_numbers<[1], [0], [0], [1], [0, 0, 1, 1], [], []>} : vector<48x128xbf16>, vector<128x128xbf16>, vector<48x128xf32> -> vector<48x128xf32>
    %c4 = arith.constant 4 : index
    %c0_40 = arith.constant 0 : index
    %c0_41 = arith.constant 0 : index
    %43 = vector.load %arg2[%c4, %c0_40, %c0_41] : memref<9x128x128xbf16, #tpu.memory_space<vmem>>, vector<1x128x128xbf16>
    %44 = vector.shape_cast %43 : vector<1x128x128xbf16> to vector<128x128xbf16>
    %cst_42 = arith.constant dense<0.000000e+00> : vector<48x128xf32>
    %45 = tpu.matmul %38, %44, %cst_42 {dimension_numbers = #tpu.dot_dimension_numbers<[1], [0], [0], [1], [0, 0, 1, 1], [], []>} : vector<48x128xbf16>, vector<128x128xbf16>, vector<48x128xf32> -> vector<48x128xf32>
    %46 = arith.addf %42, %45 : vector<48x128xf32>
    %c5 = arith.constant 5 : index
    %c0_43 = arith.constant 0 : index
    %c0_44 = arith.constant 0 : index
    %47 = vector.load %arg2[%c5, %c0_43, %c0_44] : memref<9x128x128xbf16, #tpu.memory_space<vmem>>, vector<1x128x128xbf16>
    %48 = vector.shape_cast %47 : vector<1x128x128xbf16> to vector<128x128xbf16>
    %cst_45 = arith.constant dense<0.000000e+00> : vector<48x128xf32>
    %49 = tpu.matmul %39, %48, %cst_45 {dimension_numbers = #tpu.dot_dimension_numbers<[1], [0], [0], [1], [0, 0, 1, 1], [], []>} : vector<48x128xbf16>, vector<128x128xbf16>, vector<48x128xf32> -> vector<48x128xf32>
    %50 = arith.addf %46, %49 : vector<48x128xf32>
    %c1_46 = arith.constant 1 : index
    %c0_47 = arith.constant 0 : index
    %c0_48 = arith.constant 0 : index
    %51 = vector.load %arg3[%c1_46, %c0_47, %c0_48] : memref<3x1x128xf32, #tpu.memory_space<vmem>>, vector<1x1x128xf32>
    %52 = vector.shape_cast %51 : vector<1x1x128xf32> to vector<1x128xf32>
    %53 = vector.broadcast %52 : vector<1x128xf32> to vector<48x128xf32>
    %54 = arith.addf %50, %53 : vector<48x128xf32>
    %cst_49 = arith.constant 0.000000e+00 : f32
    %55 = vector.broadcast %cst_49 : f32 to vector<48x128xf32>
    %56 = arith.maximumf %54, %55 : vector<48x128xf32>
    %57 = arith.truncf %56 : vector<48x128xf32> to vector<48x128xbf16>
    %c16_50 = arith.constant 16 : index
    %c0_51 = arith.constant 0 : index
    %58 = vector.load %arg5[%c16_50, %c0_51] : memref<80x128xbf16, #tpu.memory_space<vmem>>, vector<48x128xbf16>
    tpu.vector_store %arg5[%c16_50, %c0_51], %57 {strides = array<i32>} : memref<80x128xbf16, #tpu.memory_space<vmem>>, vector<48x128xbf16>,
    %c32_52 = arith.constant 32 : index
    %c0_53 = arith.constant 0 : index
    %59 = vector.load %arg5[%c32_52, %c0_53] : memref<80x128xbf16, #tpu.memory_space<vmem>>, vector<16x128xbf16>
    tpu.vector_store %arg5[%c32_52, %c0_53], %0 {strides = array<i32>} : memref<80x128xbf16, #tpu.memory_space<vmem>>, vector<16x128xbf16>,
    %c7 = arith.constant 7 : index
    %c0_54 = arith.constant 0 : index
    %60 = vector.load %arg5[%c7, %c0_54] : memref<80x128xbf16, #tpu.memory_space<vmem>>, vector<48x128xbf16>
    %c16_55 = arith.constant 16 : index
    %c0_56 = arith.constant 0 : index
    %61 = vector.load %arg5[%c16_55, %c0_56] : memref<80x128xbf16, #tpu.memory_space<vmem>>, vector<48x128xbf16>
    %c25 = arith.constant 25 : index
    %c0_57 = arith.constant 0 : index
    %62 = vector.load %arg5[%c25, %c0_57] : memref<80x128xbf16, #tpu.memory_space<vmem>>, vector<48x128xbf16>
    %c6 = arith.constant 6 : index
    %c0_58 = arith.constant 0 : index
    %c0_59 = arith.constant 0 : index
    %63 = vector.load %arg2[%c6, %c0_58, %c0_59] : memref<9x128x128xbf16, #tpu.memory_space<vmem>>, vector<1x128x128xbf16>
    %64 = vector.shape_cast %63 : vector<1x128x128xbf16> to vector<128x128xbf16>
    %cst_60 = arith.constant dense<0.000000e+00> : vector<48x128xf32>
    %65 = tpu.matmul %60, %64, %cst_60 {dimension_numbers = #tpu.dot_dimension_numbers<[1], [0], [0], [1], [0, 0, 1, 1], [], []>} : vector<48x128xbf16>, vector<128x128xbf16>, vector<48x128xf32> -> vector<48x128xf32>
    %c7_61 = arith.constant 7 : index
    %c0_62 = arith.constant 0 : index
    %c0_63 = arith.constant 0 : index
    %66 = vector.load %arg2[%c7_61, %c0_62, %c0_63] : memref<9x128x128xbf16, #tpu.memory_space<vmem>>, vector<1x128x128xbf16>
    %67 = vector.shape_cast %66 : vector<1x128x128xbf16> to vector<128x128xbf16>
    %cst_64 = arith.constant dense<0.000000e+00> : vector<48x128xf32>
    %68 = tpu.matmul %61, %67, %cst_64 {dimension_numbers = #tpu.dot_dimension_numbers<[1], [0], [0], [1], [0, 0, 1, 1], [], []>} : vector<48x128xbf16>, vector<128x128xbf16>, vector<48x128xf32> -> vector<48x128xf32>
    %69 = arith.addf %65, %68 : vector<48x128xf32>
    %c8 = arith.constant 8 : index
    %c0_65 = arith.constant 0 : index
    %c0_66 = arith.constant 0 : index
    %70 = vector.load %arg2[%c8, %c0_65, %c0_66] : memref<9x128x128xbf16, #tpu.memory_space<vmem>>, vector<1x128x128xbf16>
    %71 = vector.shape_cast %70 : vector<1x128x128xbf16> to vector<128x128xbf16>
    %cst_67 = arith.constant dense<0.000000e+00> : vector<48x128xf32>
    %72 = tpu.matmul %62, %71, %cst_67 {dimension_numbers = #tpu.dot_dimension_numbers<[1], [0], [0], [1], [0, 0, 1, 1], [], []>} : vector<48x128xbf16>, vector<128x128xbf16>, vector<48x128xf32> -> vector<48x128xf32>
    %73 = arith.addf %69, %72 : vector<48x128xf32>
    %c2_68 = arith.constant 2 : index
    %c0_69 = arith.constant 0 : index
    %c0_70 = arith.constant 0 : index
    %74 = vector.load %arg3[%c2_68, %c0_69, %c0_70] : memref<3x1x128xf32, #tpu.memory_space<vmem>>, vector<1x1x128xf32>
    %75 = vector.shape_cast %74 : vector<1x1x128xf32> to vector<1x128xf32>
    %76 = vector.broadcast %75 : vector<1x128xf32> to vector<48x128xf32>
    %77 = arith.addf %73, %76 : vector<48x128xf32>
    %78 = vector.extract_strided_slice %77 {offsets = [0, 0], sizes = [16, 128], strides = [1, 1]} : vector<48x128xf32> to vector<16x128xf32>
    %c0_71 = arith.constant 0 : index
    %c0_72 = arith.constant 0 : index
    %79 = vector.load %arg1[%c0_71, %c0_72] : memref<32x128xf32, #tpu.memory_space<vmem>>, vector<16x128xf32>
    %80 = arith.addf %78, %79 : vector<16x128xf32>
    %cst_73 = arith.constant 0.000000e+00 : f32
    %81 = vector.broadcast %cst_73 : f32 to vector<16x128xf32>
    %82 = arith.maximumf %80, %81 : vector<16x128xf32>
    %c0_74 = arith.constant 0 : index
    %c0_75 = arith.constant 0 : index
    %83 = vector.load %arg4[%c0_74, %c0_75] : memref<32x128xf32, #tpu.memory_space<vmem>>, vector<16x128xf32>
    tpu.vector_store %arg4[%c0_74, %c0_75], %82 {strides = array<i32>} : memref<32x128xf32, #tpu.memory_space<vmem>>, vector<16x128xf32>,
    %84 = vector.extract_strided_slice %77 {offsets = [32, 0], sizes = [16, 128], strides = [1, 1]} : vector<48x128xf32> to vector<16x128xf32>
    %c16_76 = arith.constant 16 : index
    %c0_77 = arith.constant 0 : index
    %85 = vector.load %arg1[%c16_76, %c0_77] : memref<32x128xf32, #tpu.memory_space<vmem>>, vector<16x128xf32>
    %86 = arith.addf %84, %85 : vector<16x128xf32>
    %cst_78 = arith.constant 0.000000e+00 : f32
    %87 = vector.broadcast %cst_78 : f32 to vector<16x128xf32>
    %88 = arith.maximumf %86, %87 : vector<16x128xf32>
    %c16_79 = arith.constant 16 : index
    %c0_80 = arith.constant 0 : index
    %89 = vector.load %arg4[%c16_79, %c0_80] : memref<32x128xf32, #tpu.memory_space<vmem>>, vector<16x128xf32>
    tpu.vector_store %arg4[%c16_79, %c0_80], %88 {strides = array<i32>} : memref<32x128xf32, #tpu.memory_space<vmem>>, vector<16x128xf32>,
    return
  }
  func.func @transform_0(%arg0: i32) -> (i32, i32) {
    %c0_i32 = arith.constant 0 : i32
    %c0_i32_0 = arith.constant 0 : i32
    return %arg0, %c0_i32 : i32, i32
  }
  func.func @transform_1(%arg0: i32) -> (i32, i32, i32) {
    %c0_i32 = arith.constant 0 : i32
    %c0_i32_0 = arith.constant 0 : i32
    %c0_i32_1 = arith.constant 0 : i32
    %c0_i32_2 = arith.constant 0 : i32
    return %c0_i32, %c0_i32_0, %c0_i32_1 : i32, i32, i32
  }
  func.func @transform_2(%arg0: i32) -> (i32, i32, i32) {
    %c0_i32 = arith.constant 0 : i32
    %c0_i32_0 = arith.constant 0 : i32
    %c0_i32_1 = arith.constant 0 : i32
    %c0_i32_2 = arith.constant 0 : i32
    return %c0_i32, %c0_i32_0, %c0_i32_1 : i32, i32, i32
  }
  func.func @transform_3(%arg0: i32) -> (i32, i32) {
    %c0_i32 = arith.constant 0 : i32
    %c0_i32_0 = arith.constant 0 : i32
    return %arg0, %c0_i32 : i32, i32
  }
}

</mosaic_0001>

<llo_original>
// kernel: tpu_custom_call.1
$region0: #{tpu_custom_call.1}
  #allocation0 [shape = 'u32[]', space=smem, size = 0x4, offset = 0x4, fixed_abs, tag = 'smem constant byte address 0x4 - core index']
  #allocation1 [shape = 'u32[144,128]{1,0:T(1,128)}', space=vmem, size = 0x12000, scoped, tag = 'internal scratch']
  #allocation2 [shape = 'bf16[80,128]{1,0:T(16,128)(2,1)}', space=vmem, size = 0x5000, scoped, tag = 'scratch operand']
  %s0 = inlined_call_operand.hbm [shape: f32[32,128], index: 0, kind: input, shape index: {}]
  %s1 = inlined_call_operand.hbm [shape: bf16[9,128,128], index: 1, kind: input, shape index: {}]
  %s2 = inlined_call_operand.vmem [shape: f32[3,1,128], index: 2, kind: input, shape index: {}]
  %s3 = inlined_call_operand.hbm [shape: f32[32,128], index: 3, kind: output, shape index: {}]
  %s4 = sld [smem:[#allocation0]]
  $region30: #{tpu_custom_call.1} parent=0
    _
  %s6 = ssub.s32 1, %s4
  %s7 = scalar_select 0, %s6, %s4
  $region1: #{tpu_custom_call.1} parent=0
    #allocation3 [shape = 'u8[16384]{0}', space=vmem, size = 0x4000, scoped, tag = 'input window, operand 0, single buffered']
    #allocation4 [shape = 's32[1]{0}', space=sflag, size = 0x4, scoped, tag = 'scoped memory for tpu_custom_call.1']
    #allocation5 [shape = 's32[1]{0}', space=sflag, size = 0x4, scoped, tag = 'scoped memory for tpu_custom_call.1']
    #allocation6 [shape = 'u8[294912]{0}', space=vmem, size = 0x48000, scoped, tag = 'input window, operand 1, single buffered']
    #allocation7 [shape = 's32[1]{0}', space=sflag, size = 0x4, scoped, tag = 'scoped memory for tpu_custom_call.1']
    #allocation8 [shape = 'u8[16384]{0}', space=vmem, size = 0x4000, scoped, tag = 'output window, operand 0, single buffered']
    %8 = vsyncpa [#allocation4], 0
    %9 = vsyncpa [#allocation7], 0
    %10 = vsyncpa [#allocation5], 0
    // Predicated region
    $region2: #{tpu_custom_call.1} parent=1 // pred_check
      _
    $region3: #{tpu_custom_call.1} parent=1 // pred_check_branch
      %12 = sbr.rel (0) target = $region5
    $region4: #{tpu_custom_call.1} parent=1 // pred_region
      %s14 = ssub.s32 512, 512
      %15 = vsyncadd [#allocation4], %s14
      %s16 = sshll.u32 [#allocation3], 4
      %s17 = int_to_ptr.vmem [resolvable:$true] %s16
      %22 = dma.hbm_to_vmem [thread:$0]  %s0, 512, %s17, [#allocation4], 128, 128, 8
    $region5: #{tpu_custom_call.1} parent=1 // pred_fallthru
      _
    // Predicated region
    $region6: #{tpu_custom_call.1} parent=1 // pred_check
      _
    $region7: #{tpu_custom_call.1} parent=1 // pred_check_branch
      %24 = sbr.rel (0) target = $region9
    $region8: #{tpu_custom_call.1} parent=1 // pred_region
      %s26 = ssub.s32 9216, 9216
      %27 = vsyncadd [#allocation7], %s26
      %s28 = sshll.u32 [#allocation6], 4
      %s29 = int_to_ptr.vmem [resolvable:$true] %s28
      %34 = dma.hbm_to_vmem [thread:$0]  %s1, 9216, %s29, [#allocation7], 64, 64, 4
    $region9: #{tpu_custom_call.1} parent=1 // pred_fallthru
      _
    // Predicated region
    $region10: #{tpu_custom_call.1} parent=1 // pred_check
      _
    $region11: #{tpu_custom_call.1} parent=1 // pred_check_branch
      %36 = sbr.rel (0) target = $region13
    $region12: #{tpu_custom_call.1} parent=1 // pred_region
      _
    $region13: #{tpu_custom_call.1} parent=1 // pred_fallthru
      _
    // Predicated region
    $region14: #{tpu_custom_call.1} parent=1 // pred_check
      _
    $region15: #{tpu_custom_call.1} parent=1 // pred_check_branch
      %38 = sbr.rel (0) target = $region17
    $region16: #{tpu_custom_call.1} parent=1 // pred_region
      %39 = dma.done [#allocation4], 512
    $region17: #{tpu_custom_call.1} parent=1 // pred_fallthru
      _
    // Predicated region
    $region18: #{tpu_custom_call.1} parent=1 // pred_check
      _
    $region19: #{tpu_custom_call.1} parent=1 // pred_check_branch
      %41 = sbr.rel (0) target = $region21
    $region20: #{tpu_custom_call.1} parent=1 // pred_region
      %42 = dma.done [#allocation7], 9216
    $region21: #{tpu_custom_call.1} parent=1 // pred_fallthru
      _
    %44 = vst [vmem:[#allocation2] sm:$0xff] 0
    %45 = vst [vmem:[#allocation2 + $0x10] sm:$0xff] 0
    %46 = vst [vmem:[#allocation2 + $0x20] sm:$0xff] 0
    %v47 = vld [vmem:[#allocation3] sm:$0xff]
    %v48 = vld [vmem:[#allocation3 + $0x8] sm:$0xff]
    %v49 = vmax.f32 %v47, 0.0
    %v50 = vmax.f32 %v48, 0.0
    %v51 = vpack.c.bf16 %v50, %v49
    %52 = vst [vmem:[#allocation2 + $0x8] sm:$0xff] %v51
    %v53 = vld [vmem:[#allocation3 + $0x10] sm:$0xff]
    %v54 = vld [vmem:[#allocation3 + $0x18] sm:$0xff]
    %v55 = vmax.f32 %v53, 0.0
    %v56 = vmax.f32 %v54, 0.0
    %v57 = vpack.c.bf16 %v56, %v55
    %58 = vst [vmem:[#allocation2 + $0x18] sm:$0xff] %v57
    %v59 = vld [vmem:[#allocation2] sm:$0x80]
    %v60 = vld [vmem:[#allocation2 + $0x8] sm:$0xff]
    %v61 = vld [vmem:[#allocation2 + $0x10] sm:$0xff]
    %v62 = vld [vmem:[#allocation2 + $0x18] sm:$0xff]
    %v63 = vld [vmem:[#allocation2 + $0x8] sm:$0xff]
    %v64 = vld [vmem:[#allocation2 + $0x10] sm:$0xff]
    %v65 = vld [vmem:[#allocation2 + $0x18] sm:$0xff]
    %v66 = vld [vmem:[#allocation2 + $0x20] sm:$0x1]
    %v67 = vld [vmem:[#allocation6] sm:$0xf]
    %v68 = vld [vmem:[#allocation6 + $0x4] sm:$0xf]
    %v69 = vld [vmem:[#allocation6 + $0x8] sm:$0xf]
    %v70 = vld [vmem:[#allocation6 + $0xc] sm:$0xf]
    %v71 = vld [vmem:[#allocation6 + $0x10] sm:$0xf]
    %v72 = vld [vmem:[#allocation6 + $0x14] sm:$0xf]
    %v73 = vld [vmem:[#allocation6 + $0x18] sm:$0xf]
    %v74 = vld [vmem:[#allocation6 + $0x1c] sm:$0xf]
    %v75 = vld [vmem:[#allocation6 + $0x20] sm:$0xf]
    %v76 = vld [vmem:[#allocation6 + $0x24] sm:$0xf]
    %v77 = vld [vmem:[#allocation6 + $0x28] sm:$0xf]
    %v78 = vld [vmem:[#allocation6 + $0x2c] sm:$0xf]
    %v79 = vld [vmem:[#allocation6 + $0x30] sm:$0xf]
    %v80 = vld [vmem:[#allocation6 + $0x34] sm:$0xf]
    %v81 = vld [vmem:[#allocation6 + $0x38] sm:$0xf]
    %v82 = vld [vmem:[#allocation6 + $0x3c] sm:$0xf]
    %s83 = scalar_lea.vmem [#allocation6], 64
    %v84 = vld [vmem:[%s83] sm:$0xf]
    %v85 = vld [vmem:[%s83 + $0x4] sm:$0xf]
    %v86 = vld [vmem:[%s83 + $0x8] sm:$0xf]
    %v87 = vld [vmem:[%s83 + $0xc] sm:$0xf]
    %v88 = vld [vmem:[%s83 + $0x10] sm:$0xf]
    %v89 = vld [vmem:[%s83 + $0x14] sm:$0xf]
    %v90 = vld [vmem:[%s83 + $0x18] sm:$0xf]
    %v91 = vld [vmem:[%s83 + $0x1c] sm:$0xf]
    %v92 = vld [vmem:[%s83 + $0x20] sm:$0xf]
    %v93 = vld [vmem:[%s83 + $0x24] sm:$0xf]
    %v94 = vld [vmem:[%s83 + $0x28] sm:$0xf]
    %v95 = vld [vmem:[%s83 + $0x2c] sm:$0xf]
    %v96 = vld [vmem:[%s83 + $0x30] sm:$0xf]
    %v97 = vld [vmem:[%s83 + $0x34] sm:$0xf]
    %v98 = vld [vmem:[%s83 + $0x38] sm:$0xf]
    %v99 = vld [vmem:[%s83 + $0x3c] sm:$0xf]
    %v116 = vunpack.c.l.b16 %v84
    %v117 = vunpack.c.l.b16 %v85
    %v118 = vunpack.c.l.b16 %v86
    %v119 = vunpack.c.l.b16 %v87
    %v120 = vunpack.c.l.b16 %v88
    %v121 = vunpack.c.l.b16 %v89
    %v122 = vunpack.c.l.b16 %v90
    %v123 = vunpack.c.l.b16 %v91
    %v124 = vunpack.c.l.b16 %v92
    %v125 = vunpack.c.l.b16 %v93
    %v126 = vunpack.c.l.b16 %v94
    %v127 = vunpack.c.l.b16 %v95
    %v128 = vunpack.c.l.b16 %v96
    %v129 = vunpack.c.l.b16 %v97
    %v130 = vunpack.c.l.b16 %v98
    %v131 = vunpack.c.l.b16 %v99
    %v132 = vpack.c.b16 %v117, %v116
    %v133 = vpack.c.b16 %v119, %v118
    %v134 = vpack.c.b16 %v121, %v120
    %v135 = vpack.c.b16 %v123, %v122
    %v136 = vpack.c.b16 %v125, %v124
    %v137 = vpack.c.b16 %v127, %v126
    %v138 = vpack.c.b16 %v129, %v128
    %v139 = vpack.c.b16 %v131, %v130
    %148 = vmatprep.subr.bf16.mxu0 0
    %149 = vmatpush1.bf16.msra.mxu0 %v132
    %150 = vmatprep.subr.bf16.mxu0 0
    %151 = vmatpush1.bf16.msra.mxu0 %v133
    %152 = vmatprep.subr.bf16.mxu0 0
    %153 = vmatpush1.bf16.msra.mxu0 %v134
    %154 = vmatprep.subr.bf16.mxu0 0
    %155 = vmatpush1.bf16.msra.mxu0 %v135
    %156 = vmatprep.subr.bf16.mxu0 0
    %157 = vmatpush1.bf16.msra.mxu0 %v136
    %158 = vmatprep.subr.bf16.mxu0 0
    %159 = vmatpush1.bf16.msra.mxu0 %v137
    %160 = vmatprep.subr.bf16.mxu0 0
    %161 = vmatpush1.bf16.msra.mxu0 %v138
    %162 = vmatprep.subr.bf16.mxu0 0
    %163 = vmatpush1.bf16.msra.mxu0 %v139
    %164 = vmatprep.subr.bf16.mxu0 0
    %165 = vmatpush1.bf16.msra.mxu0 0
    %166 = vmatprep.subr.bf16.mxu0 0
    %167 = vmatpush1.bf16.msra.mxu0 0
    %168 = vmatprep.subr.bf16.mxu0 0
    %169 = vmatpush1.bf16.msra.mxu0 0
    %170 = vmatprep.subr.bf16.mxu0 0
    %171 = vmatpush1.bf16.msra.mxu0 0
    %172 = vmatprep.subr.bf16.mxu0 0
    %173 = vmatpush1.bf16.msra.mxu0 0
    %174 = vmatprep.subr.bf16.mxu0 0
    %175 = vmatpush1.bf16.msra.mxu0 0
    %176 = vmatprep.subr.bf16.mxu0 0
    %177 = vmatpush1.bf16.msra.mxu0 0
    %178 = vmatprep.subr.bf16.mxu0 0
    %179 = vmatpush1.bf16.msra.mxu0 0
    %180 = vmatprep.mubr.bf16.mxu0 0
    %181 = vmatmul.mubr.bf16.gmra.mrb[0].mxu0 %v60
    %v182 = vpop.f32.mrb[0].mxu0
    %v183 = vadd.f32 0.0, %v182
    %v184 = vpop.f32.mrb[0].mxu0
    %v185 = vpop.f32.mrb[0].mxu0
    %v186 = vadd.f32 0.0, %v185
    %v187 = vpop.f32.mrb[0].mxu0
    %188 = vmatprep.mubr.bf16.mxu0 0
    %189 = vmatmul.mubr.bf16.gmra.mrb[0].mxu0 %v61
    %v190 = vpop.f32.mrb[0].mxu0
    %v191 = vadd.f32 0.0, %v190
    %v192 = vpop.f32.mrb[0].mxu0
    %v193 = vpop.f32.mrb[0].mxu0
    %v194 = vadd.f32 0.0, %v193
    %v195 = vpop.f32.mrb[0].mxu0
    %196 = vmatprep.mubr.bf16.mxu0 0
    %197 = vmatmul.mubr.bf16.gmra.mrb[0].mxu0 %v62
    %v198 = vpop.f32.mrb[0].mxu0
    %v199 = vadd.f32 0.0, %v198
    %v200 = vpop.f32.mrb[0].mxu0
    %v201 = vpop.f32.mrb[0].mxu0
    %v202 = vadd.f32 0.0, %v201
    %v203 = vpop.f32.mrb[0].mxu0
    %204 = vdwg.mxu0
    %vm205 = vsmask.f32 256
    %v207 = vshrl.u32 %v59, 16
    %v209 = vrot.slane %v207, 7
    %v211 = vshrl.u32 %v60, 16
    %v213 = vrot.slane %v211, 7
    %v214 = vshll.u32 %v60, 16
    %v216 = vor.u32 %v213, %v214
    %v217 = vsel %vm205, %v209, %v216
    %v219 = vshrl.u32 %v61, 16
    %v221 = vrot.slane %v219, 7
    %v222 = vshll.u32 %v61, 16
    %v224 = vor.u32 %v221, %v222
    %v225 = vsel %vm205, %v213, %v224
    %v227 = vshrl.u32 %v62, 16
    %v229 = vrot.slane %v227, 7
    %v230 = vshll.u32 %v62, 16
    %v232 = vor.u32 %v229, %v230
    %v233 = vsel %vm205, %v221, %v232
    %v253 = vunpack.c.l.b16 %v67
    %v254 = vunpack.c.l.b16 %v68
    %v255 = vunpack.c.l.b16 %v69
    %v256 = vunpack.c.l.b16 %v70
    %v257 = vunpack.c.l.b16 %v71
    %v258 = vunpack.c.l.b16 %v72
    %v259 = vunpack.c.l.b16 %v73
    %v260 = vunpack.c.l.b16 %v74
    %v261 = vunpack.c.l.b16 %v75
    %v262 = vunpack.c.l.b16 %v76
    %v263 = vunpack.c.l.b16 %v77
    %v264 = vunpack.c.l.b16 %v78
    %v265 = vunpack.c.l.b16 %v79
    %v266 = vunpack.c.l.b16 %v80
    %v267 = vunpack.c.l.b16 %v81
    %v268 = vunpack.c.l.b16 %v82
    %v269 = vpack.c.b16 %v254, %v253
    %v270 = vpack.c.b16 %v256, %v255
    %v271 = vpack.c.b16 %v258, %v257
    %v272 = vpack.c.b16 %v260, %v259
    %v273 = vpack.c.b16 %v262, %v261
    %v274 = vpack.c.b16 %v264, %v263
    %v275 = vpack.c.b16 %v266, %v265
    %v276 = vpack.c.b16 %v268, %v267
    %285 = vmatprep.subr.bf16.mxu0 0
    %286 = vmatpush1.bf16.msra.mxu0 %v269
    %287 = vmatprep.subr.bf16.mxu0 0
    %288 = vmatpush1.bf16.msra.mxu0 %v270
    %289 = vmatprep.subr.bf16.mxu0 0
    %290 = vmatpush1.bf16.msra.mxu0 %v271
    %291 = vmatprep.subr.bf16.mxu0 0
    %292 = vmatpush1.bf16.msra.mxu0 %v272
    %293 = vmatprep.subr.bf16.mxu0 0
    %294 = vmatpush1.bf16.msra.mxu0 %v273
    %295 = vmatprep.subr.bf16.mxu0 0
    %296 = vmatpush1.bf16.msra.mxu0 %v274
    %297 = vmatprep.subr.bf16.mxu0 0
    %298 = vmatpush1.bf16.msra.mxu0 %v275
    %299 = vmatprep.subr.bf16.mxu0 0
    %300 = vmatpush1.bf16.msra.mxu0 %v276
    %301 = vmatprep.subr.bf16.mxu0 0
    %302 = vmatpush1.bf16.msra.mxu0 0
    %303 = vmatprep.subr.bf16.mxu0 0
    %304 = vmatpush1.bf16.msra.mxu0 0
    %305 = vmatprep.subr.bf16.mxu0 0
    %306 = vmatpush1.bf16.msra.mxu0 0
    %307 = vmatprep.subr.bf16.mxu0 0
    %308 = vmatpush1.bf16.msra.mxu0 0
    %309 = vmatprep.subr.bf16.mxu0 0
    %310 = vmatpush1.bf16.msra.mxu0 0
    %311 = vmatprep.subr.bf16.mxu0 0
    %312 = vmatpush1.bf16.msra.mxu0 0
    %313 = vmatprep.subr.bf16.mxu0 0
    %314 = vmatpush1.bf16.msra.mxu0 0
    %315 = vmatprep.subr.bf16.mxu0 0
    %316 = vmatpush1.bf16.msra.mxu0 0
    %317 = vmatprep.mubr.bf16.mxu0 0
    %318 = vmatmul.mubr.bf16.gmra.mrb[0].mxu0 %v217
    %v319 = vpop.f32.mrb[0].mxu0
    %v320 = vadd.f32 %v183, %v319
    %v321 = vpop.f32.mrb[0].mxu0
    %v322 = vpop.f32.mrb[0].mxu0
    %v323 = vadd.f32 %v186, %v322
    %v324 = vpop.f32.mrb[0].mxu0
    %325 = vmatprep.mubr.bf16.mxu0 0
    %326 = vmatmul.mubr.bf16.gmra.mrb[0].mxu0 %v225
    %v327 = vpop.f32.mrb[0].mxu0
    %v328 = vadd.f32 %v191, %v327
    %v329 = vpop.f32.mrb[0].mxu0
    %v330 = vpop.f32.mrb[0].mxu0
    %v331 = vadd.f32 %v194, %v330
    %v332 = vpop.f32.mrb[0].mxu0
    %333 = vmatprep.mubr.bf16.mxu0 0
    %334 = vmatmul.mubr.bf16.gmra.mrb[0].mxu0 %v233
    %v335 = vpop.f32.mrb[0].mxu0
    %v336 = vadd.f32 %v199, %v335
    %v337 = vpop.f32.mrb[0].mxu0
    %v338 = vpop.f32.mrb[0].mxu0
    %v339 = vadd.f32 %v202, %v338
    %v340 = vpop.f32.mrb[0].mxu0
    %341 = vdwg.mxu0
    %s342 = scalar_lea.vmem [#allocation6], 128
    %v343 = vld [vmem:[%s342] sm:$0xf]
    %v344 = vld [vmem:[%s342 + $0x4] sm:$0xf]
    %v345 = vld [vmem:[%s342 + $0x8] sm:$0xf]
    %v346 = vld [vmem:[%s342 + $0xc] sm:$0xf]
    %v347 = vld [vmem:[%s342 + $0x10] sm:$0xf]
    %v348 = vld [vmem:[%s342 + $0x14] sm:$0xf]
    %v349 = vld [vmem:[%s342 + $0x18] sm:$0xf]
    %v350 = vld [vmem:[%s342 + $0x1c] sm:$0xf]
    %v351 = vld [vmem:[%s342 + $0x20] sm:$0xf]
    %v352 = vld [vmem:[%s342 + $0x24] sm:$0xf]
    %v353 = vld [vmem:[%s342 + $0x28] sm:$0xf]
    %v354 = vld [vmem:[%s342 + $0x2c] sm:$0xf]
    %v355 = vld [vmem:[%s342 + $0x30] sm:$0xf]
    %v356 = vld [vmem:[%s342 + $0x34] sm:$0xf]
    %v357 = vld [vmem:[%s342 + $0x38] sm:$0xf]
    %v358 = vld [vmem:[%s342 + $0x3c] sm:$0xf]
    %vm359 = vsmask.f32 7424
    %v361 = vshrl.u32 %v63, 16
    %v363 = vshll.u32 %v63, 16
    %v365 = vrot.slane %v363, 1
    %v366 = vor.u32 %v361, %v365
    %v368 = vshll.u32 %v64, 16
    %v370 = vrot.slane %v368, 1
    %v371 = vsel %vm359, %v366, %v370
    %v372 = vshrl.u32 %v64, 16
    %v374 = vor.u32 %v372, %v370
    %v376 = vshll.u32 %v65, 16
    %v378 = vrot.slane %v376, 1
    %v379 = vsel %vm359, %v374, %v378
    %v380 = vshrl.u32 %v65, 16
    %v382 = vor.u32 %v380, %v378
    %v384 = vshll.u32 %v66, 16
    %v386 = vrot.slane %v384, 1
    %v387 = vsel %vm359, %v382, %v386
    %v407 = vunpack.c.l.b16 %v343
    %v408 = vunpack.c.l.b16 %v344
    %v409 = vunpack.c.l.b16 %v345
    %v410 = vunpack.c.l.b16 %v346
    %v411 = vunpack.c.l.b16 %v347
    %v412 = vunpack.c.l.b16 %v348
    %v413 = vunpack.c.l.b16 %v349
    %v414 = vunpack.c.l.b16 %v350
    %v415 = vunpack.c.l.b16 %v351
    %v416 = vunpack.c.l.b16 %v352
    %v417 = vunpack.c.l.b16 %v353
    %v418 = vunpack.c.l.b16 %v354
    %v419 = vunpack.c.l.b16 %v355
    %v420 = vunpack.c.l.b16 %v356
    %v421 = vunpack.c.l.b16 %v357
    %v422 = vunpack.c.l.b16 %v358
    %v423 = vpack.c.b16 %v408, %v407
    %v424 = vpack.c.b16 %v410, %v409
    %v425 = vpack.c.b16 %v412, %v411
    %v426 = vpack.c.b16 %v414, %v413
    %v427 = vpack.c.b16 %v416, %v415
    %v428 = vpack.c.b16 %v418, %v417
    %v429 = vpack.c.b16 %v420, %v419
    %v430 = vpack.c.b16 %v422, %v421
    %439 = vmatprep.subr.bf16.mxu0 0
    %440 = vmatpush1.bf16.msra.mxu0 %v423
    %441 = vmatprep.subr.bf16.mxu0 0
    %442 = vmatpush1.bf16.msra.mxu0 %v424
    %443 = vmatprep.subr.bf16.mxu0 0
    %444 = vmatpush1.bf16.msra.mxu0 %v425
    %445 = vmatprep.subr.bf16.mxu0 0
    %446 = vmatpush1.bf16.msra.mxu0 %v426
    %447 = vmatprep.subr.bf16.mxu0 0
    %448 = vmatpush1.bf16.msra.mxu0 %v427
    %449 = vmatprep.subr.bf16.mxu0 0
    %450 = vmatpush1.bf16.msra.mxu0 %v428
    %451 = vmatprep.subr.bf16.mxu0 0
    %452 = vmatpush1.bf16.msra.mxu0 %v429
    %453 = vmatprep.subr.bf16.mxu0 0
    %454 = vmatpush1.bf16.msra.mxu0 %v430
    %455 = vmatprep.subr.bf16.mxu0 0
    %456 = vmatpush1.bf16.msra.mxu0 0
    %457 = vmatprep.subr.bf16.mxu0 0
    %458 = vmatpush1.bf16.msra.mxu0 0
    %459 = vmatprep.subr.bf16.mxu0 0
    %460 = vmatpush1.bf16.msra.mxu0 0
    %461 = vmatprep.subr.bf16.mxu0 0
    %462 = vmatpush1.bf16.msra.mxu0 0
    %463 = vmatprep.subr.bf16.mxu0 0
    %464 = vmatpush1.bf16.msra.mxu0 0
    %465 = vmatprep.subr.bf16.mxu0 0
    %466 = vmatpush1.bf16.msra.mxu0 0
    %467 = vmatprep.subr.bf16.mxu0 0
    %468 = vmatpush1.bf16.msra.mxu0 0
    %469 = vmatprep.subr.bf16.mxu0 0
    %470 = vmatpush1.bf16.msra.mxu0 0
    %471 = vmatprep.mubr.bf16.mxu0 0
    %472 = vmatmul.mubr.bf16.gmra.mrb[0].mxu0 %v371
    %v473 = vpop.f32.mrb[0].mxu0
    %v474 = vadd.f32 0.0, %v473
    %v475 = vpop.f32.mrb[0].mxu0
    %v476 = vpop.f32.mrb[0].mxu0
    %v477 = vadd.f32 0.0, %v476
    %v478 = vpop.f32.mrb[0].mxu0
    %479 = vmatprep.mubr.bf16.mxu0 0
    %480 = vmatmul.mubr.bf16.gmra.mrb[0].mxu0 %v379
    %v481 = vpop.f32.mrb[0].mxu0
    %v482 = vadd.f32 0.0, %v481
    %v483 = vpop.f32.mrb[0].mxu0
    %v484 = vpop.f32.mrb[0].mxu0
    %v485 = vadd.f32 0.0, %v484
    %v486 = vpop.f32.mrb[0].mxu0
    %487 = vmatprep.mubr.bf16.mxu0 0
    %488 = vmatmul.mubr.bf16.gmra.mrb[0].mxu0 %v387
    %v489 = vpop.f32.mrb[0].mxu0
    %v490 = vadd.f32 0.0, %v489
    %v491 = vpop.f32.mrb[0].mxu0
    %v492 = vpop.f32.mrb[0].mxu0
    %v493 = vadd.f32 0.0, %v492
    %v494 = vpop.f32.mrb[0].mxu0
    %495 = vdwg.mxu0
    %v496 = vadd.f32 %v320, %v474
    %v497 = vadd.f32 %v323, %v477
    %v498 = vadd.f32 %v328, %v482
    %v499 = vadd.f32 %v331, %v485
    %v500 = vadd.f32 %v336, %v490
    %v501 = vadd.f32 %v339, %v493
    %v502 = vld [vmem:[%s2] sm:$0x1]
    %v504 = vlaneseq
    %v505 = vshrl.u32 %v504, 7
    %v506 = vsub.s32 0, %v505
    %v507 = vrot.slane %v502, %v506
    %v509 = vadd.f32 %v496, %v507
    %v510 = vadd.f32 %v497, %v507
    %v511 = vadd.f32 %v498, %v507
    %v512 = vadd.f32 %v499, %v507
    %v513 = vadd.f32 %v500, %v507
    %v514 = vadd.f32 %v501, %v507
    %v515 = vmax.f32 %v509, 0.0
    %v516 = vmax.f32 %v510, 0.0
    %v517 = vmax.f32 %v511, 0.0
    %v518 = vmax.f32 %v512, 0.0
    %v519 = vmax.f32 %v513, 0.0
    %v520 = vmax.f32 %v514, 0.0
    %v521 = vpack.c.bf16 %v516, %v515
    %v522 = vpack.c.bf16 %v518, %v517
    %v523 = vpack.c.bf16 %v520, %v519
    %524 = vst [vmem:[#allocation2 + $0x8] sm:$0xff] %v521
    %525 = vst [vmem:[#allocation2 + $0x10] sm:$0xff] %v522
    %526 = vst [vmem:[#allocation2 + $0x18] sm:$0xff] %v523
    %527 = vst [vmem:[#allocation2 + $0x10] sm:$0xff] 0
    %v528 = vld [vmem:[#allocation2] sm:$0xc0]
    %v529 = vld [vmem:[#allocation2 + $0x8] sm:$0xff]
    %v530 = vld [vmem:[#allocation2 + $0x10] sm:$0xff]
    %v531 = vld [vmem:[#allocation2 + $0x18] sm:$0x7f]
    %v532 = vld [vmem:[#allocation2 + $0x18] sm:$0xff]
    %v533 = vld [vmem:[#allocation2 + $0x8] sm:$0xfe]
    %v534 = vld [vmem:[#allocation2 + $0x10] sm:$0xff]
    %v535 = vld [vmem:[#allocation2 + $0x18] sm:$0xff]
    %v536 = vld [vmem:[#allocation2 + $0x20] sm:$0x3]
    %s537 = scalar_lea.vmem [#allocation6], 192
    %v538 = vld [vmem:[%s537] sm:$0xf]
    %v539 = vld [vmem:[%s537 + $0x4] sm:$0xf]
    %v540 = vld [vmem:[%s537 + $0x8] sm:$0xf]
    %v541 = vld [vmem:[%s537 + $0xc] sm:$0xf]
    %v542 = vld [vmem:[%s537 + $0x10] sm:$0xf]
    %v543 = vld [vmem:[%s537 + $0x14] sm:$0xf]
    %v544 = vld [vmem:[%s537 + $0x18] sm:$0xf]
    %v545 = vld [vmem:[%s537 + $0x1c] sm:$0xf]
    %v546 = vld [vmem:[%s537 + $0x20] sm:$0xf]
    %v547 = vld [vmem:[%s537 + $0x24] sm:$0xf]
    %v548 = vld [vmem:[%s537 + $0x28] sm:$0xf]
    %v549 = vld [vmem:[%s537 + $0x2c] sm:$0xf]
    %v550 = vld [vmem:[%s537 + $0x30] sm:$0xf]
    %v551 = vld [vmem:[%s537 + $0x34] sm:$0xf]
    %v552 = vld [vmem:[%s537 + $0x38] sm:$0xf]
    %v553 = vld [vmem:[%s537 + $0x3c] sm:$0xf]
    %s554 = scalar_lea.vmem [#allocation6], 256
    %v555 = vld [vmem:[%s554] sm:$0xf]
    %v556 = vld [vmem:[%s554 + $0x4] sm:$0xf]
    %v557 = vld [vmem:[%s554 + $0x8] sm:$0xf]
    %v558 = vld [vmem:[%s554 + $0xc] sm:$0xf]
    %v559 = vld [vmem:[%s554 + $0x10] sm:$0xf]
    %v560 = vld [vmem:[%s554 + $0x14] sm:$0xf]
    %v561 = vld [vmem:[%s554 + $0x18] sm:$0xf]
    %v562 = vld [vmem:[%s554 + $0x1c] sm:$0xf]
    %v563 = vld [vmem:[%s554 + $0x20] sm:$0xf]
    %v564 = vld [vmem:[%s554 + $0x24] sm:$0xf]
    %v565 = vld [vmem:[%s554 + $0x28] sm:$0xf]
    %v566 = vld [vmem:[%s554 + $0x2c] sm:$0xf]
    %v567 = vld [vmem:[%s554 + $0x30] sm:$0xf]
    %v568 = vld [vmem:[%s554 + $0x34] sm:$0xf]
    %v569 = vld [vmem:[%s554 + $0x38] sm:$0xf]
    %v570 = vld [vmem:[%s554 + $0x3c] sm:$0xf]
    %v587 = vunpack.c.l.b16 %v555
    %v588 = vunpack.c.l.b16 %v556
    %v589 = vunpack.c.l.b16 %v557
    %v590 = vunpack.c.l.b16 %v558
    %v591 = vunpack.c.l.b16 %v559
    %v592 = vunpack.c.l.b16 %v560
    %v593 = vunpack.c.l.b16 %v561
    %v594 = vunpack.c.l.b16 %v562
    %v595 = vunpack.c.l.b16 %v563
    %v596 = vunpack.c.l.b16 %v564
    %v597 = vunpack.c.l.b16 %v565
    %v598 = vunpack.c.l.b16 %v566
    %v599 = vunpack.c.l.b16 %v567
    %v600 = vunpack.c.l.b16 %v568
    %v601 = vunpack.c.l.b16 %v569
    %v602 = vunpack.c.l.b16 %v570
    %v603 = vpack.c.b16 %v588, %v587
    %v604 = vpack.c.b16 %v590, %v589
    %v605 = vpack.c.b16 %v592, %v591
    %v606 = vpack.c.b16 %v594, %v593
    %v607 = vpack.c.b16 %v596, %v595
    %v608 = vpack.c.b16 %v598, %v597
    %v609 = vpack.c.b16 %v600, %v599
    %v610 = vpack.c.b16 %v602, %v601
    %619 = vmatprep.subr.bf16.mxu0 0
    %620 = vmatpush1.bf16.msra.mxu0 %v603
    %621 = vmatprep.subr.bf16.mxu0 0
    %622 = vmatpush1.bf16.msra.mxu0 %v604
    %623 = vmatprep.subr.bf16.mxu0 0
    %624 = vmatpush1.bf16.msra.mxu0 %v605
    %625 = vmatprep.subr.bf16.mxu0 0
    %626 = vmatpush1.bf16.msra.mxu0 %v606
    %627 = vmatprep.subr.bf16.mxu0 0
    %628 = vmatpush1.bf16.msra.mxu0 %v607
    %629 = vmatprep.subr.bf16.mxu0 0
    %630 = vmatpush1.bf16.msra.mxu0 %v608
    %631 = vmatprep.subr.bf16.mxu0 0
    %632 = vmatpush1.bf16.msra.mxu0 %v609
    %633 = vmatprep.subr.bf16.mxu0 0
    %634 = vmatpush1.bf16.msra.mxu0 %v610
    %635 = vmatprep.subr.bf16.mxu0 0
    %636 = vmatpush1.bf16.msra.mxu0 0
    %637 = vmatprep.subr.bf16.mxu0 0
    %638 = vmatpush1.bf16.msra.mxu0 0
    %639 = vmatprep.subr.bf16.mxu0 0
    %640 = vmatpush1.bf16.msra.mxu0 0
    %641 = vmatprep.subr.bf16.mxu0 0
    %642 = vmatpush1.bf16.msra.mxu0 0
    %643 = vmatprep.subr.bf16.mxu0 0
    %644 = vmatpush1.bf16.msra.mxu0 0
    %645 = vmatprep.subr.bf16.mxu0 0
    %646 = vmatpush1.bf16.msra.mxu0 0
    %647 = vmatprep.subr.bf16.mxu0 0
    %648 = vmatpush1.bf16.msra.mxu0 0
    %649 = vmatprep.subr.bf16.mxu0 0
    %650 = vmatpush1.bf16.msra.mxu0 0
    %651 = vmatprep.mubr.bf16.mxu0 0
    %652 = vmatmul.mubr.bf16.gmra.mrb[0].mxu0 %v529
    %v653 = vpop.f32.mrb[0].mxu0
    %v654 = vadd.f32 0.0, %v653
    %v655 = vpop.f32.mrb[0].mxu0
    %v656 = vpop.f32.mrb[0].mxu0
    %v657 = vadd.f32 0.0, %v656
    %v658 = vpop.f32.mrb[0].mxu0
    %659 = vmatprep.mubr.bf16.mxu0 0
    %660 = vmatmul.mubr.bf16.gmra.mrb[0].mxu0 %v530
    %v661 = vpop.f32.mrb[0].mxu0
    %v662 = vadd.f32 0.0, %v661
    %v663 = vpop.f32.mrb[0].mxu0
    %v664 = vpop.f32.mrb[0].mxu0
    %v665 = vadd.f32 0.0, %v664
    %v666 = vpop.f32.mrb[0].mxu0
    %667 = vmatprep.mubr.bf16.mxu0 0
    %668 = vmatmul.mubr.bf16.gmra.mrb[0].mxu0 %v532
    %v669 = vpop.f32.mrb[0].mxu0
    %v670 = vadd.f32 0.0, %v669
    %v671 = vpop.f32.mrb[0].mxu0
    %v672 = vpop.f32.mrb[0].mxu0
    %v673 = vadd.f32 0.0, %v672
    %v674 = vpop.f32.mrb[0].mxu0
    %675 = vdwg.mxu0
    %vm676 = vsmask.f32 1280
    %v678 = vshrl.u32 %v528, 16
    %v680 = vrot.slane %v678, 6
    %v681 = vshll.u32 %v528, 16
    %v683 = vrot.slane %v681, 7
    %v684 = vor.u32 %v680, %v683
    %v686 = vshrl.u32 %v529, 16
    %v688 = vrot.slane %v686, 6
    %v689 = vshll.u32 %v529, 16
    %v691 = vrot.slane %v689, 7
    %v692 = vor.u32 %v688, %v691
    %v693 = vsel %vm676, %v684, %v692
    %v695 = vshrl.u32 %v530, 16
    %v697 = vrot.slane %v695, 6
    %v698 = vshll.u32 %v530, 16
    %v700 = vrot.slane %v698, 7
    %v701 = vor.u32 %v697, %v700
    %v702 = vsel %vm676, %v692, %v701
    %v704 = vshrl.u32 %v531, 16
    %v706 = vrot.slane %v704, 6
    %v707 = vshll.u32 %v531, 16
    %v709 = vrot.slane %v707, 7
    %v710 = vor.u32 %v706, %v709
    %v711 = vsel %vm676, %v701, %v710
    %v731 = vunpack.c.l.b16 %v538
    %v732 = vunpack.c.l.b16 %v539
    %v733 = vunpack.c.l.b16 %v540
    %v734 = vunpack.c.l.b16 %v541
    %v735 = vunpack.c.l.b16 %v542
    %v736 = vunpack.c.l.b16 %v543
    %v737 = vunpack.c.l.b16 %v544
    %v738 = vunpack.c.l.b16 %v545
    %v739 = vunpack.c.l.b16 %v546
    %v740 = vunpack.c.l.b16 %v547
    %v741 = vunpack.c.l.b16 %v548
    %v742 = vunpack.c.l.b16 %v549
    %v743 = vunpack.c.l.b16 %v550
    %v744 = vunpack.c.l.b16 %v551
    %v745 = vunpack.c.l.b16 %v552
    %v746 = vunpack.c.l.b16 %v553
    %v747 = vpack.c.b16 %v732, %v731
    %v748 = vpack.c.b16 %v734, %v733
    %v749 = vpack.c.b16 %v736, %v735
    %v750 = vpack.c.b16 %v738, %v737
    %v751 = vpack.c.b16 %v740, %v739
    %v752 = vpack.c.b16 %v742, %v741
    %v753 = vpack.c.b16 %v744, %v743
    %v754 = vpack.c.b16 %v746, %v745
    %763 = vmatprep.subr.bf16.mxu0 0
    %764 = vmatpush1.bf16.msra.mxu0 %v747
    %765 = vmatprep.subr.bf16.mxu0 0
    %766 = vmatpush1.bf16.msra.mxu0 %v748
    %767 = vmatprep.subr.bf16.mxu0 0
    %768 = vmatpush1.bf16.msra.mxu0 %v749
    %769 = vmatprep.subr.bf16.mxu0 0
    %770 = vmatpush1.bf16.msra.mxu0 %v750
    %771 = vmatprep.subr.bf16.mxu0 0
    %772 = vmatpush1.bf16.msra.mxu0 %v751
    %773 = vmatprep.subr.bf16.mxu0 0
    %774 = vmatpush1.bf16.msra.mxu0 %v752
    %775 = vmatprep.subr.bf16.mxu0 0
    %776 = vmatpush1.bf16.msra.mxu0 %v753
    %777 = vmatprep.subr.bf16.mxu0 0
    %778 = vmatpush1.bf16.msra.mxu0 %v754
    %779 = vmatprep.subr.bf16.mxu0 0
    %780 = vmatpush1.bf16.msra.mxu0 0
    %781 = vmatprep.subr.bf16.mxu0 0
    %782 = vmatpush1.bf16.msra.mxu0 0
    %783 = vmatprep.subr.bf16.mxu0 0
    %784 = vmatpush1.bf16.msra.mxu0 0
    %785 = vmatprep.subr.bf16.mxu0 0
    %786 = vmatpush1.bf16.msra.mxu0 0
    %787 = vmatprep.subr.bf16.mxu0 0
    %788 = vmatpush1.bf16.msra.mxu0 0
    %789 = vmatprep.subr.bf16.mxu0 0
    %790 = vmatpush1.bf16.msra.mxu0 0
    %791 = vmatprep.subr.bf16.mxu0 0
    %792 = vmatpush1.bf16.msra.mxu0 0
    %793 = vmatprep.subr.bf16.mxu0 0
    %794 = vmatpush1.bf16.msra.mxu0 0
    %795 = vmatprep.mubr.bf16.mxu0 0
    %796 = vmatmul.mubr.bf16.gmra.mrb[0].mxu0 %v693
    %v797 = vpop.f32.mrb[0].mxu0
    %v798 = vadd.f32 %v654, %v797
    %v799 = vpop.f32.mrb[0].mxu0
    %v800 = vpop.f32.mrb[0].mxu0
    %v801 = vadd.f32 %v657, %v800
    %v802 = vpop.f32.mrb[0].mxu0
    %803 = vmatprep.mubr.bf16.mxu0 0
    %804 = vmatmul.mubr.bf16.gmra.mrb[0].mxu0 %v702
    %v805 = vpop.f32.mrb[0].mxu0
    %v806 = vadd.f32 %v662, %v805
    %v807 = vpop.f32.mrb[0].mxu0
    %v808 = vpop.f32.mrb[0].mxu0
    %v809 = vadd.f32 %v665, %v808
    %v810 = vpop.f32.mrb[0].mxu0
    %811 = vmatprep.mubr.bf16.mxu0 0
    %812 = vmatmul.mubr.bf16.gmra.mrb[0].mxu0 %v711
    %v813 = vpop.f32.mrb[0].mxu0
    %v814 = vadd.f32 %v670, %v813
    %v815 = vpop.f32.mrb[0].mxu0
    %v816 = vpop.f32.mrb[0].mxu0
    %v817 = vadd.f32 %v673, %v816
    %v818 = vpop.f32.mrb[0].mxu0
    %819 = vdwg.mxu0
    %s820 = scalar_lea.vmem [#allocation6], 320
    %v821 = vld [vmem:[%s820] sm:$0xf]
    %v822 = vld [vmem:[%s820 + $0x4] sm:$0xf]
    %v823 = vld [vmem:[%s820 + $0x8] sm:$0xf]
    %v824 = vld [vmem:[%s820 + $0xc] sm:$0xf]
    %v825 = vld [vmem:[%s820 + $0x10] sm:$0xf]
    %v826 = vld [vmem:[%s820 + $0x14] sm:$0xf]
    %v827 = vld [vmem:[%s820 + $0x18] sm:$0xf]
    %v828 = vld [vmem:[%s820 + $0x1c] sm:$0xf]
    %v829 = vld [vmem:[%s820 + $0x20] sm:$0xf]
    %v830 = vld [vmem:[%s820 + $0x24] sm:$0xf]
    %v831 = vld [vmem:[%s820 + $0x28] sm:$0xf]
    %v832 = vld [vmem:[%s820 + $0x2c] sm:$0xf]
    %v833 = vld [vmem:[%s820 + $0x30] sm:$0xf]
    %v834 = vld [vmem:[%s820 + $0x34] sm:$0xf]
    %v835 = vld [vmem:[%s820 + $0x38] sm:$0xf]
    %v836 = vld [vmem:[%s820 + $0x3c] sm:$0xf]
    %vm837 = vsmask.f32 6400
    %v839 = vshrl.u32 %v533, 16
    %v841 = vrot.slane %v839, 1
    %v842 = vshll.u32 %v533, 16
    %v844 = vrot.slane %v842, 2
    %v845 = vor.u32 %v841, %v844
    %v847 = vshrl.u32 %v534, 16
    %v849 = vrot.slane %v847, 1
    %v850 = vshll.u32 %v534, 16
    %v852 = vrot.slane %v850, 2
    %v853 = vor.u32 %v849, %v852
    %v854 = vsel %vm837, %v845, %v853
    %v856 = vshrl.u32 %v535, 16
    %v858 = vrot.slane %v856, 1
    %v859 = vshll.u32 %v535, 16
    %v861 = vrot.slane %v859, 2
    %v862 = vor.u32 %v858, %v861
    %v863 = vsel %vm837, %v853, %v862
    %v865 = vshrl.u32 %v536, 16
    %v867 = vrot.slane %v865, 1
    %v868 = vshll.u32 %v536, 16
    %v870 = vrot.slane %v868, 2
    %v871 = vor.u32 %v867, %v870
    %v872 = vsel %vm837, %v862, %v871
    %v892 = vunpack.c.l.b16 %v821
    %v893 = vunpack.c.l.b16 %v822
    %v894 = vunpack.c.l.b16 %v823
    %v895 = vunpack.c.l.b16 %v824
    %v896 = vunpack.c.l.b16 %v825
    %v897 = vunpack.c.l.b16 %v826
    %v898 = vunpack.c.l.b16 %v827
    %v899 = vunpack.c.l.b16 %v828
    %v900 = vunpack.c.l.b16 %v829
    %v901 = vunpack.c.l.b16 %v830
    %v902 = vunpack.c.l.b16 %v831
    %v903 = vunpack.c.l.b16 %v832
    %v904 = vunpack.c.l.b16 %v833
    %v905 = vunpack.c.l.b16 %v834
    %v906 = vunpack.c.l.b16 %v835
    %v907 = vunpack.c.l.b16 %v836
    %v908 = vpack.c.b16 %v893, %v892
    %v909 = vpack.c.b16 %v895, %v894
    %v910 = vpack.c.b16 %v897, %v896
    %v911 = vpack.c.b16 %v899, %v898
    %v912 = vpack.c.b16 %v901, %v900
    %v913 = vpack.c.b16 %v903, %v902
    %v914 = vpack.c.b16 %v905, %v904
    %v915 = vpack.c.b16 %v907, %v906
    %924 = vmatprep.subr.bf16.mxu0 0
    %925 = vmatpush1.bf16.msra.mxu0 %v908
    %926 = vmatprep.subr.bf16.mxu0 0
    %927 = vmatpush1.bf16.msra.mxu0 %v909
    %928 = vmatprep.subr.bf16.mxu0 0
    %929 = vmatpush1.bf16.msra.mxu0 %v910
    %930 = vmatprep.subr.bf16.mxu0 0
    %931 = vmatpush1.bf16.msra.mxu0 %v911
    %932 = vmatprep.subr.bf16.mxu0 0
    %933 = vmatpush1.bf16.msra.mxu0 %v912
    %934 = vmatprep.subr.bf16.mxu0 0
    %935 = vmatpush1.bf16.msra.mxu0 %v913
    %936 = vmatprep.subr.bf16.mxu0 0
    %937 = vmatpush1.bf16.msra.mxu0 %v914
    %938 = vmatprep.subr.bf16.mxu0 0
    %939 = vmatpush1.bf16.msra.mxu0 %v915
    %940 = vmatprep.subr.bf16.mxu0 0
    %941 = vmatpush1.bf16.msra.mxu0 0
    %942 = vmatprep.subr.bf16.mxu0 0
    %943 = vmatpush1.bf16.msra.mxu0 0
    %944 = vmatprep.subr.bf16.mxu0 0
    %945 = vmatpush1.bf16.msra.mxu0 0
    %946 = vmatprep.subr.bf16.mxu0 0
    %947 = vmatpush1.bf16.msra.mxu0 0
    %948 = vmatprep.subr.bf16.mxu0 0
    %949 = vmatpush1.bf16.msra.mxu0 0
    %950 = vmatprep.subr.bf16.mxu0 0
    %951 = vmatpush1.bf16.msra.mxu0 0
    %952 = vmatprep.subr.bf16.mxu0 0
    %953 = vmatpush1.bf16.msra.mxu0 0
    %954 = vmatprep.subr.bf16.mxu0 0
    %955 = vmatpush1.bf16.msra.mxu0 0
    %956 = vmatprep.mubr.bf16.mxu0 0
    %957 = vmatmul.mubr.bf16.gmra.mrb[0].mxu0 %v854
    %v958 = vpop.f32.mrb[0].mxu0
    %v959 = vadd.f32 0.0, %v958
    %v960 = vpop.f32.mrb[0].mxu0
    %v961 = vpop.f32.mrb[0].mxu0
    %v962 = vadd.f32 0.0, %v961
    %v963 = vpop.f32.mrb[0].mxu0
    %964 = vmatprep.mubr.bf16.mxu0 0
    %965 = vmatmul.mubr.bf16.gmra.mrb[0].mxu0 %v863
    %v966 = vpop.f32.mrb[0].mxu0
    %v967 = vadd.f32 0.0, %v966
    %v968 = vpop.f32.mrb[0].mxu0
    %v969 = vpop.f32.mrb[0].mxu0
    %v970 = vadd.f32 0.0, %v969
    %v971 = vpop.f32.mrb[0].mxu0
    %972 = vmatprep.mubr.bf16.mxu0 0
    %973 = vmatmul.mubr.bf16.gmra.mrb[0].mxu0 %v872
    %v974 = vpop.f32.mrb[0].mxu0
    %v975 = vadd.f32 0.0, %v974
    %v976 = vpop.f32.mrb[0].mxu0
    %v977 = vpop.f32.mrb[0].mxu0
    %v978 = vadd.f32 0.0, %v977
    %v979 = vpop.f32.mrb[0].mxu0
    %980 = vdwg.mxu0
    %v981 = vadd.f32 %v798, %v959
    %v982 = vadd.f32 %v801, %v962
    %v983 = vadd.f32 %v806, %v967
    %v984 = vadd.f32 %v809, %v970
    %v985 = vadd.f32 %v814, %v975
    %v986 = vadd.f32 %v817, %v978
    %s987 = scalar_lea.vmem %s2, 1
    %v988 = vld [vmem:[%s987] sm:$0x1]
    %v990 = vlaneseq
    %v991 = vshrl.u32 %v990, 7
    %v992 = vsub.s32 0, %v991
    %v993 = vrot.slane %v988, %v992
    %v995 = vadd.f32 %v981, %v993
    %v996 = vadd.f32 %v982, %v993
    %v997 = vadd.f32 %v983, %v993
    %v998 = vadd.f32 %v984, %v993
    %v999 = vadd.f32 %v985, %v993
    %v1000 = vadd.f32 %v986, %v993
    %v1001 = vmax.f32 %v995, 0.0
    %v1002 = vmax.f32 %v996, 0.0
    %v1003 = vmax.f32 %v997, 0.0
    %v1004 = vmax.f32 %v998, 0.0
    %v1005 = vmax.f32 %v999, 0.0
    %v1006 = vmax.f32 %v1000, 0.0
    %v1007 = vpack.c.bf16 %v1002, %v1001
    %v1008 = vpack.c.bf16 %v1004, %v1003
    %v1009 = vpack.c.bf16 %v1006, %v1005
    %1010 = vst [vmem:[#allocation2 + $0x8] sm:$0xff] %v1007
    %1011 = vst [vmem:[#allocation2 + $0x10] sm:$0xff] %v1008
    %1012 = vst [vmem:[#allocation2 + $0x18] sm:$0xff] %v1009
    %1013 = vst [vmem:[#allocation2 + $0x10] sm:$0xff] 0
    %v1014 = vld [vmem:[#allocation2] sm:$0xf8]
    %v1015 = vld [vmem:[#allocation2 + $0x8] sm:$0xff]
    %v1016 = vld [vmem:[#allocation2 + $0x10] sm:$0xff]
    %v1017 = vld [vmem:[#allocation2 + $0x18] sm:$0xf]
    %v1018 = vld [vmem:[#allocation2 + $0x18] sm:$0xff]
    %v1019 = vld [vmem:[#allocation2 + $0x8] sm:$0xf0]
    %v1020 = vld [vmem:[#allocation2 + $0x10] sm:$0xff]
    %v1021 = vld [vmem:[#allocation2 + $0x18] sm:$0xff]
    %v1022 = vld [vmem:[#allocation2 + $0x20] sm:$0x1f]
    %s1023 = scalar_lea.vmem [#allocation6], 384
    %v1024 = vld [vmem:[%s1023] sm:$0xf]
    %v1025 = vld [vmem:[%s1023 + $0x4] sm:$0xf]
    %v1026 = vld [vmem:[%s1023 + $0x8] sm:$0xf]
    %v1027 = vld [vmem:[%s1023 + $0xc] sm:$0xf]
    %v1028 = vld [vmem:[%s1023 + $0x10] sm:$0xf]
    %v1029 = vld [vmem:[%s1023 + $0x14] sm:$0xf]
    %v1030 = vld [vmem:[%s1023 + $0x18] sm:$0xf]
    %v1031 = vld [vmem:[%s1023 + $0x1c] sm:$0xf]
    %v1032 = vld [vmem:[%s1023 + $0x20] sm:$0xf]
    %v1033 = vld [vmem:[%s1023 + $0x24] sm:$0xf]
    %v1034 = vld [vmem:[%s1023 + $0x28] sm:$0xf]
    %v1035 = vld [vmem:[%s1023 + $0x2c] sm:$0xf]
    %v1036 = vld [vmem:[%s1023 + $0x30] sm:$0xf]
    %v1037 = vld [vmem:[%s1023 + $0x34] sm:$0xf]
    %v1038 = vld [vmem:[%s1023 + $0x38] sm:$0xf]
    %v1039 = vld [vmem:[%s1023 + $0x3c] sm:$0xf]
    %s1040 = scalar_lea.vmem [#allocation6], 448
    %v1041 = vld [vmem:[%s1040] sm:$0xf]
    %v1042 = vld [vmem:[%s1040 + $0x4] sm:$0xf]
    %v1043 = vld [vmem:[%s1040 + $0x8] sm:$0xf]
    %v1044 = vld [vmem:[%s1040 + $0xc] sm:$0xf]
    %v1045 = vld [vmem:[%s1040 + $0x10] sm:$0xf]
    %v1046 = vld [vmem:[%s1040 + $0x14] sm:$0xf]
    %v1047 = vld [vmem:[%s1040 + $0x18] sm:$0xf]
    %v1048 = vld [vmem:[%s1040 + $0x1c] sm:$0xf]
    %v1049 = vld [vmem:[%s1040 + $0x20] sm:$0xf]
    %v1050 = vld [vmem:[%s1040 + $0x24] sm:$0xf]
    %v1051 = vld [vmem:[%s1040 + $0x28] sm:$0xf]
    %v1052 = vld [vmem:[%s1040 + $0x2c] sm:$0xf]
    %v1053 = vld [vmem:[%s1040 + $0x30] sm:$0xf]
    %v1054 = vld [vmem:[%s1040 + $0x34] sm:$0xf]
    %v1055 = vld [vmem:[%s1040 + $0x38] sm:$0xf]
    %v1056 = vld [vmem:[%s1040 + $0x3c] sm:$0xf]
    %v1073 = vunpack.c.l.b16 %v1041
    %v1074 = vunpack.c.l.b16 %v1042
    %v1075 = vunpack.c.l.b16 %v1043
    %v1076 = vunpack.c.l.b16 %v1044
    %v1077 = vunpack.c.l.b16 %v1045
    %v1078 = vunpack.c.l.b16 %v1046
    %v1079 = vunpack.c.l.b16 %v1047
    %v1080 = vunpack.c.l.b16 %v1048
    %v1081 = vunpack.c.l.b16 %v1049
    %v1082 = vunpack.c.l.b16 %v1050
    %v1083 = vunpack.c.l.b16 %v1051
    %v1084 = vunpack.c.l.b16 %v1052
    %v1085 = vunpack.c.l.b16 %v1053
    %v1086 = vunpack.c.l.b16 %v1054
    %v1087 = vunpack.c.l.b16 %v1055
    %v1088 = vunpack.c.l.b16 %v1056
    %v1089 = vpack.c.b16 %v1074, %v1073
    %v1090 = vpack.c.b16 %v1076, %v1075
    %v1091 = vpack.c.b16 %v1078, %v1077
    %v1092 = vpack.c.b16 %v1080, %v1079
    %v1093 = vpack.c.b16 %v1082, %v1081
    %v1094 = vpack.c.b16 %v1084, %v1083
    %v1095 = vpack.c.b16 %v1086, %v1085
    %v1096 = vpack.c.b16 %v1088, %v1087
    %1105 = vmatprep.subr.bf16.mxu0 0
    %1106 = vmatpush1.bf16.msra.mxu0 %v1089
    %1107 = vmatprep.subr.bf16.mxu0 0
    %1108 = vmatpush1.bf16.msra.mxu0 %v1090
    %1109 = vmatprep.subr.bf16.mxu0 0
    %1110 = vmatpush1.bf16.msra.mxu0 %v1091
    %1111 = vmatprep.subr.bf16.mxu0 0
    %1112 = vmatpush1.bf16.msra.mxu0 %v1092
    %1113 = vmatprep.subr.bf16.mxu0 0
    %1114 = vmatpush1.bf16.msra.mxu0 %v1093
    %1115 = vmatprep.subr.bf16.mxu0 0
    %1116 = vmatpush1.bf16.msra.mxu0 %v1094
    %1117 = vmatprep.subr.bf16.mxu0 0
    %1118 = vmatpush1.bf16.msra.mxu0 %v1095
    %1119 = vmatprep.subr.bf16.mxu0 0
    %1120 = vmatpush1.bf16.msra.mxu0 %v1096
    %1121 = vmatprep.subr.bf16.mxu0 0
    %1122 = vmatpush1.bf16.msra.mxu0 0
    %1123 = vmatprep.subr.bf16.mxu0 0
    %1124 = vmatpush1.bf16.msra.mxu0 0
    %1125 = vmatprep.subr.bf16.mxu0 0
    %1126 = vmatpush1.bf16.msra.mxu0 0
    %1127 = vmatprep.subr.bf16.mxu0 0
    %1128 = vmatpush1.bf16.msra.mxu0 0
    %1129 = vmatprep.subr.bf16.mxu0 0
    %1130 = vmatpush1.bf16.msra.mxu0 0
    %1131 = vmatprep.subr.bf16.mxu0 0
    %1132 = vmatpush1.bf16.msra.mxu0 0
    %1133 = vmatprep.subr.bf16.mxu0 0
    %1134 = vmatpush1.bf16.msra.mxu0 0
    %1135 = vmatprep.subr.bf16.mxu0 0
    %1136 = vmatpush1.bf16.msra.mxu0 0
    %1137 = vmatprep.mubr.bf16.mxu0 0
    %1138 = vmatmul.mubr.bf16.gmra.mrb[0].mxu0 %v1015
    %v1139 = vpop.f32.mrb[0].mxu0
    %v1140 = vadd.f32 0.0, %v1139
    %v1141 = vpop.f32.mrb[0].mxu0
    %v1142 = vpop.f32.mrb[0].mxu0
    %v1143 = vadd.f32 0.0, %v1142
    %v1144 = vpop.f32.mrb[0].mxu0
    %1145 = vmatprep.mubr.bf16.mxu0 0
    %1146 = vmatmul.mubr.bf16.gmra.mrb[0].mxu0 %v1016
    %v1147 = vpop.f32.mrb[0].mxu0
    %v1148 = vpop.f32.mrb[0].mxu0
    %v1149 = vpop.f32.mrb[0].mxu0
    %v1150 = vpop.f32.mrb[0].mxu0
    %1151 = vmatprep.mubr.bf16.mxu0 0
    %1152 = vmatmul.mubr.bf16.gmra.mrb[0].mxu0 %v1018
    %v1153 = vpop.f32.mrb[0].mxu0
    %v1154 = vadd.f32 0.0, %v1153
    %v1155 = vpop.f32.mrb[0].mxu0
    %v1156 = vpop.f32.mrb[0].mxu0
    %v1157 = vadd.f32 0.0, %v1156
    %v1158 = vpop.f32.mrb[0].mxu0
    %1159 = vdwg.mxu0
    %vm1160 = vsmask.f32 4352
    %v1162 = vshrl.u32 %v1014, 16
    %v1164 = vrot.slane %v1162, 3
    %v1165 = vshll.u32 %v1014, 16
    %v1167 = vrot.slane %v1165, 4
    %v1168 = vor.u32 %v1164, %v1167
    %v1170 = vshrl.u32 %v1015, 16
    %v1172 = vrot.slane %v1170, 3
    %v1173 = vshll.u32 %v1015, 16
    %v1175 = vrot.slane %v1173, 4
    %v1176 = vor.u32 %v1172, %v1175
    %v1177 = vsel %vm1160, %v1168, %v1176
    %v1179 = vshrl.u32 %v1016, 16
    %v1181 = vrot.slane %v1179, 3
    %v1182 = vshll.u32 %v1016, 16
    %v1184 = vrot.slane %v1182, 4
    %v1185 = vor.u32 %v1181, %v1184
    %v1186 = vsel %vm1160, %v1176, %v1185
    %v1188 = vshrl.u32 %v1017, 16
    %v1190 = vrot.slane %v1188, 3
    %v1191 = vshll.u32 %v1017, 16
    %v1193 = vrot.slane %v1191, 4
    %v1194 = vor.u32 %v1190, %v1193
    %v1195 = vsel %vm1160, %v1185, %v1194
    %v1215 = vunpack.c.l.b16 %v1024
    %v1216 = vunpack.c.l.b16 %v1025
    %v1217 = vunpack.c.l.b16 %v1026
    %v1218 = vunpack.c.l.b16 %v1027
    %v1219 = vunpack.c.l.b16 %v1028
    %v1220 = vunpack.c.l.b16 %v1029
    %v1221 = vunpack.c.l.b16 %v1030
    %v1222 = vunpack.c.l.b16 %v1031
    %v1223 = vunpack.c.l.b16 %v1032
    %v1224 = vunpack.c.l.b16 %v1033
    %v1225 = vunpack.c.l.b16 %v1034
    %v1226 = vunpack.c.l.b16 %v1035
    %v1227 = vunpack.c.l.b16 %v1036
    %v1228 = vunpack.c.l.b16 %v1037
    %v1229 = vunpack.c.l.b16 %v1038
    %v1230 = vunpack.c.l.b16 %v1039
    %v1231 = vpack.c.b16 %v1216, %v1215
    %v1232 = vpack.c.b16 %v1218, %v1217
    %v1233 = vpack.c.b16 %v1220, %v1219
    %v1234 = vpack.c.b16 %v1222, %v1221
    %v1235 = vpack.c.b16 %v1224, %v1223
    %v1236 = vpack.c.b16 %v1226, %v1225
    %v1237 = vpack.c.b16 %v1228, %v1227
    %v1238 = vpack.c.b16 %v1230, %v1229
    %1247 = vmatprep.subr.bf16.mxu0 0
    %1248 = vmatpush1.bf16.msra.mxu0 %v1231
    %1249 = vmatprep.subr.bf16.mxu0 0
    %1250 = vmatpush1.bf16.msra.mxu0 %v1232
    %1251 = vmatprep.subr.bf16.mxu0 0
    %1252 = vmatpush1.bf16.msra.mxu0 %v1233
    %1253 = vmatprep.subr.bf16.mxu0 0
    %1254 = vmatpush1.bf16.msra.mxu0 %v1234
    %1255 = vmatprep.subr.bf16.mxu0 0
    %1256 = vmatpush1.bf16.msra.mxu0 %v1235
    %1257 = vmatprep.subr.bf16.mxu0 0
    %1258 = vmatpush1.bf16.msra.mxu0 %v1236
    %1259 = vmatprep.subr.bf16.mxu0 0
    %1260 = vmatpush1.bf16.msra.mxu0 %v1237
    %1261 = vmatprep.subr.bf16.mxu0 0
    %1262 = vmatpush1.bf16.msra.mxu0 %v1238
    %1263 = vmatprep.subr.bf16.mxu0 0
    %1264 = vmatpush1.bf16.msra.mxu0 0
    %1265 = vmatprep.subr.bf16.mxu0 0
    %1266 = vmatpush1.bf16.msra.mxu0 0
    %1267 = vmatprep.subr.bf16.mxu0 0
    %1268 = vmatpush1.bf16.msra.mxu0 0
    %1269 = vmatprep.subr.bf16.mxu0 0
    %1270 = vmatpush1.bf16.msra.mxu0 0
    %1271 = vmatprep.subr.bf16.mxu0 0
    %1272 = vmatpush1.bf16.msra.mxu0 0
    %1273 = vmatprep.subr.bf16.mxu0 0
    %1274 = vmatpush1.bf16.msra.mxu0 0
    %1275 = vmatprep.subr.bf16.mxu0 0
    %1276 = vmatpush1.bf16.msra.mxu0 0
    %1277 = vmatprep.subr.bf16.mxu0 0
    %1278 = vmatpush1.bf16.msra.mxu0 0
    %1279 = vmatprep.mubr.bf16.mxu0 0
    %1280 = vmatmul.mubr.bf16.gmra.mrb[0].mxu0 %v1177
    %v1281 = vpop.f32.mrb[0].mxu0
    %v1282 = vadd.f32 %v1140, %v1281
    %v1283 = vpop.f32.mrb[0].mxu0
    %v1284 = vpop.f32.mrb[0].mxu0
    %v1285 = vadd.f32 %v1143, %v1284
    %v1286 = vpop.f32.mrb[0].mxu0
    %1287 = vmatprep.mubr.bf16.mxu0 0
    %1288 = vmatmul.mubr.bf16.gmra.mrb[0].mxu0 %v1186
    %v1289 = vpop.f32.mrb[0].mxu0
    %v1290 = vpop.f32.mrb[0].mxu0
    %v1291 = vpop.f32.mrb[0].mxu0
    %v1292 = vpop.f32.mrb[0].mxu0
    %1293 = vmatprep.mubr.bf16.mxu0 0
    %1294 = vmatmul.mubr.bf16.gmra.mrb[0].mxu0 %v1195
    %v1295 = vpop.f32.mrb[0].mxu0
    %v1296 = vadd.f32 %v1154, %v1295
    %v1297 = vpop.f32.mrb[0].mxu0
    %v1298 = vpop.f32.mrb[0].mxu0
    %v1299 = vadd.f32 %v1157, %v1298
    %v1300 = vpop.f32.mrb[0].mxu0
    %1301 = vdwg.mxu0
    %s1302 = scalar_lea.vmem [#allocation6], 512
    %v1303 = vld [vmem:[%s1302] sm:$0xf]
    %v1304 = vld [vmem:[%s1302 + $0x4] sm:$0xf]
    %v1305 = vld [vmem:[%s1302 + $0x8] sm:$0xf]
    %v1306 = vld [vmem:[%s1302 + $0xc] sm:$0xf]
    %v1307 = vld [vmem:[%s1302 + $0x10] sm:$0xf]
    %v1308 = vld [vmem:[%s1302 + $0x14] sm:$0xf]
    %v1309 = vld [vmem:[%s1302 + $0x18] sm:$0xf]
    %v1310 = vld [vmem:[%s1302 + $0x1c] sm:$0xf]
    %v1311 = vld [vmem:[%s1302 + $0x20] sm:$0xf]
    %v1312 = vld [vmem:[%s1302 + $0x24] sm:$0xf]
    %v1313 = vld [vmem:[%s1302 + $0x28] sm:$0xf]
    %v1314 = vld [vmem:[%s1302 + $0x2c] sm:$0xf]
    %v1315 = vld [vmem:[%s1302 + $0x30] sm:$0xf]
    %v1316 = vld [vmem:[%s1302 + $0x34] sm:$0xf]
    %v1317 = vld [vmem:[%s1302 + $0x38] sm:$0xf]
    %v1318 = vld [vmem:[%s1302 + $0x3c] sm:$0xf]
    %vm1319 = vsmask.f32 3328
    %v1321 = vshrl.u32 %v1019, 16
    %v1323 = vrot.slane %v1321, 4
    %v1324 = vshll.u32 %v1019, 16
    %v1326 = vrot.slane %v1324, 5
    %v1327 = vor.u32 %v1323, %v1326
    %v1329 = vshrl.u32 %v1020, 16
    %v1331 = vrot.slane %v1329, 4
    %v1332 = vshll.u32 %v1020, 16
    %v1334 = vrot.slane %v1332, 5
    %v1335 = vor.u32 %v1331, %v1334
    %v1336 = vsel %vm1319, %v1327, %v1335
    %v1338 = vshrl.u32 %v1021, 16
    %v1340 = vrot.slane %v1338, 4
    %v1341 = vshll.u32 %v1021, 16
    %v1343 = vrot.slane %v1341, 5
    %v1344 = vor.u32 %v1340, %v1343
    %v1345 = vsel %vm1319, %v1335, %v1344
    %v1347 = vshrl.u32 %v1022, 16
    %v1349 = vrot.slane %v1347, 4
    %v1350 = vshll.u32 %v1022, 16
    %v1352 = vrot.slane %v1350, 5
    %v1353 = vor.u32 %v1349, %v1352
    %v1354 = vsel %vm1319, %v1344, %v1353
    %v1374 = vunpack.c.l.b16 %v1303
    %v1375 = vunpack.c.l.b16 %v1304
    %v1376 = vunpack.c.l.b16 %v1305
    %v1377 = vunpack.c.l.b16 %v1306
    %v1378 = vunpack.c.l.b16 %v1307
    %v1379 = vunpack.c.l.b16 %v1308
    %v1380 = vunpack.c.l.b16 %v1309
    %v1381 = vunpack.c.l.b16 %v1310
    %v1382 = vunpack.c.l.b16 %v1311
    %v1383 = vunpack.c.l.b16 %v1312
    %v1384 = vunpack.c.l.b16 %v1313
    %v1385 = vunpack.c.l.b16 %v1314
    %v1386 = vunpack.c.l.b16 %v1315
    %v1387 = vunpack.c.l.b16 %v1316
    %v1388 = vunpack.c.l.b16 %v1317
    %v1389 = vunpack.c.l.b16 %v1318
    %v1390 = vpack.c.b16 %v1375, %v1374
    %v1391 = vpack.c.b16 %v1377, %v1376
    %v1392 = vpack.c.b16 %v1379, %v1378
    %v1393 = vpack.c.b16 %v1381, %v1380
    %v1394 = vpack.c.b16 %v1383, %v1382
    %v1395 = vpack.c.b16 %v1385, %v1384
    %v1396 = vpack.c.b16 %v1387, %v1386
    %v1397 = vpack.c.b16 %v1389, %v1388
    %1406 = vmatprep.subr.bf16.mxu0 0
    %1407 = vmatpush1.bf16.msra.mxu0 %v1390
    %1408 = vmatprep.subr.bf16.mxu0 0
    %1409 = vmatpush1.bf16.msra.mxu0 %v1391
    %1410 = vmatprep.subr.bf16.mxu0 0
    %1411 = vmatpush1.bf16.msra.mxu0 %v1392
    %1412 = vmatprep.subr.bf16.mxu0 0
    %1413 = vmatpush1.bf16.msra.mxu0 %v1393
    %1414 = vmatprep.subr.bf16.mxu0 0
    %1415 = vmatpush1.bf16.msra.mxu0 %v1394
    %1416 = vmatprep.subr.bf16.mxu0 0
    %1417 = vmatpush1.bf16.msra.mxu0 %v1395
    %1418 = vmatprep.subr.bf16.mxu0 0
    %1419 = vmatpush1.bf16.msra.mxu0 %v1396
    %1420 = vmatprep.subr.bf16.mxu0 0
    %1421 = vmatpush1.bf16.msra.mxu0 %v1397
    %1422 = vmatprep.subr.bf16.mxu0 0
    %1423 = vmatpush1.bf16.msra.mxu0 0
    %1424 = vmatprep.subr.bf16.mxu0 0
    %1425 = vmatpush1.bf16.msra.mxu0 0
    %1426 = vmatprep.subr.bf16.mxu0 0
    %1427 = vmatpush1.bf16.msra.mxu0 0
    %1428 = vmatprep.subr.bf16.mxu0 0
    %1429 = vmatpush1.bf16.msra.mxu0 0
    %1430 = vmatprep.subr.bf16.mxu0 0
    %1431 = vmatpush1.bf16.msra.mxu0 0
    %1432 = vmatprep.subr.bf16.mxu0 0
    %1433 = vmatpush1.bf16.msra.mxu0 0
    %1434 = vmatprep.subr.bf16.mxu0 0
    %1435 = vmatpush1.bf16.msra.mxu0 0
    %1436 = vmatprep.subr.bf16.mxu0 0
    %1437 = vmatpush1.bf16.msra.mxu0 0
    %1438 = vmatprep.mubr.bf16.mxu0 0
    %1439 = vmatmul.mubr.bf16.gmra.mrb[0].mxu0 %v1336
    %v1440 = vpop.f32.mrb[0].mxu0
    %v1441 = vadd.f32 0.0, %v1440
    %v1442 = vpop.f32.mrb[0].mxu0
    %v1443 = vpop.f32.mrb[0].mxu0
    %v1444 = vadd.f32 0.0, %v1443
    %v1445 = vpop.f32.mrb[0].mxu0
    %1446 = vmatprep.mubr.bf16.mxu0 0
    %1447 = vmatmul.mubr.bf16.gmra.mrb[0].mxu0 %v1345
    %v1448 = vpop.f32.mrb[0].mxu0
    %v1449 = vpop.f32.mrb[0].mxu0
    %v1450 = vpop.f32.mrb[0].mxu0
    %v1451 = vpop.f32.mrb[0].mxu0
    %1452 = vmatprep.mubr.bf16.mxu0 0
    %1453 = vmatmul.mubr.bf16.gmra.mrb[0].mxu0 %v1354
    %v1454 = vpop.f32.mrb[0].mxu0
    %v1455 = vadd.f32 0.0, %v1454
    %v1456 = vpop.f32.mrb[0].mxu0
    %v1457 = vpop.f32.mrb[0].mxu0
    %v1458 = vadd.f32 0.0, %v1457
    %v1459 = vpop.f32.mrb[0].mxu0
    %1460 = vdwg.mxu0
    %v1461 = vadd.f32 %v1282, %v1441
    %v1462 = vadd.f32 %v1285, %v1444
    %v1463 = vadd.f32 %v1296, %v1455
    %v1464 = vadd.f32 %v1299, %v1458
    %s1465 = scalar_lea.vmem %s2, 2
    %v1466 = vld [vmem:[%s1465] sm:$0x1]
    %v1468 = vlaneseq
    %v1469 = vshrl.u32 %v1468, 7
    %v1470 = vsub.s32 0, %v1469
    %v1471 = vrot.slane %v1466, %v1470
    %v1473 = vadd.f32 %v1461, %v1471
    %v1474 = vadd.f32 %v1462, %v1471
    %v1475 = vadd.f32 %v1463, %v1471
    %v1476 = vadd.f32 %v1464, %v1471
    %v1477 = vld [vmem:[#allocation3] sm:$0xff]
    %v1478 = vld [vmem:[#allocation3 + $0x8] sm:$0xff]
    %v1479 = vadd.f32 %v1473, %v1477
    %v1480 = vadd.f32 %v1474, %v1478
    %v1481 = vmax.f32 %v1479, 0.0
    %v1482 = vmax.f32 %v1480, 0.0
    %1483 = vst [vmem:[#allocation8] sm:$0xff] %v1481
    %1484 = vst [vmem:[#allocation8 + $0x8] sm:$0xff] %v1482
    %v1485 = vld [vmem:[#allocation3 + $0x10] sm:$0xff]
    %v1486 = vld [vmem:[#allocation3 + $0x18] sm:$0xff]
    %v1487 = vadd.f32 %v1475, %v1485
    %v1488 = vadd.f32 %v1476, %v1486
    %v1489 = vmax.f32 %v1487, 0.0
    %v1490 = vmax.f32 %v1488, 0.0
    %1491 = vst [vmem:[#allocation8 + $0x10] sm:$0xff] %v1489
    %1492 = vst [vmem:[#allocation8 + $0x18] sm:$0xff] %v1490
    // Predicated region
    $region22: #{tpu_custom_call.1} parent=1 // pred_check
      _
    $region23: #{tpu_custom_call.1} parent=1 // pred_check_branch
      %1494 = sbr.rel (0) target = $region25
    $region24: #{tpu_custom_call.1} parent=1 // pred_region
      %s1496 = ssub.s32 512, 512
      %1497 = vsyncadd [#allocation5], %s1496
      %s1498 = sshll.u32 [#allocation8], 4
      %s1499 = int_to_ptr.vmem [resolvable:$true] %s1498
      %1504 = dma.vmem_to_hbm [thread:$0]  %s1499, 512, %s3, [#allocation5], 128, 128, 8
    $region25: #{tpu_custom_call.1} parent=1 // pred_fallthru
      _
    // Predicated region
    $region26: #{tpu_custom_call.1} parent=1 // pred_check
      _
    $region27: #{tpu_custom_call.1} parent=1 // pred_check_branch
      %1506 = sbr.rel (0) target = $region29
    $region28: #{tpu_custom_call.1} parent=1 // pred_region
      %1507 = dma.done [#allocation5], 512
    $region29: #{tpu_custom_call.1} parent=1 // pred_fallthru
      _
    %1508 = vsyncpa [#allocation4], 1
    %1509 = vsyncpa [#allocation7], 1
    %1510 = vsyncpa [#allocation5], 1

</llo_original>
